<compile_context>
chip_gen: v7x
topology: tpu7x:2x2x1
jax: 0.10.0
libtpu: 0.0.40
codegen_flags: <defaults>
</compile_context>

<pallas_src>
import jax
import jax.numpy as jnp
from jax.experimental import pallas as pl
from jax.experimental.pallas import tpu as pltpu


def _round_up(v, m):
    return (v + m - 1) // m * m


def conv_model_forward(x, w, b):
    """ConvModel.forward: valid Conv2d (stride 1) followed by *2.

    x: [B, C, H, W] f32 (NCHW), w: [OUT, C, KH, KW] f32, b: [OUT] f32
    returns [B, OUT, OH, OW] f32
    """
    B, C, H, W = x.shape
    OUT, _, KH, KW = w.shape
    OH, OW = H - KH + 1, W - KW + 1

    Np = _round_up(OUT, 128)                    # lane-padded output channels
    Mp = _round_up(OH * W, 8)                   # output rows per image (full width W)
    max_shift = (KH - 1) * W + (KW - 1)         # largest in-kernel window shift
    HWp = _round_up(Mp + max_shift, 8)          # resident rows of the flattened image

    # ---- layout plumbing only (no arithmetic): NCHW -> NHWC -> (B, H*W, C) ----
    x_flat = jnp.transpose(x, (0, 2, 3, 1)).reshape(B, H * W, C)
    x_flat = jnp.pad(x_flat, ((0, 0), (0, HWp - H * W), (0, 0)))   # zero rows for shifts

    # ---- fold *2 into the params; per-offset (C, OUT) slabs, bf16, lane-padded ----
    wk = jnp.transpose(2.0 * w, (2, 3, 1, 0)).reshape(KH * KW, C, OUT)   # idx = i*KW + j
    wk = jnp.pad(wk, ((0, 0), (0, 0), (0, Np - OUT))).astype(jnp.bfloat16)
    bvec = jnp.pad((2.0 * b).reshape(1, OUT), ((0, 0), (0, Np - OUT)))   # f32

    def kernel(x_ref, w_ref, b_ref, o_ref):
        # x_ref: (HWp, C) f32   — one image, flattened (H, W), channel on lanes
        # w_ref: (KH*KW, C, Np) bf16 — per-offset weight slabs (*2 folded in)
        # b_ref: (1, Np) f32    — bias (*2 folded in)
        # o_ref: (Mp, Np) f32
        acc = jnp.zeros((Mp, Np), jnp.float32)
        for idx in range(KH * KW):              # static unroll over kernel taps
            i, j = divmod(idx, KW)
            shift = i * W + j                   # static shift -> static slice
            win = x_ref[shift:shift + Mp, :].astype(jnp.bfloat16)   # (Mp, C)
            acc = acc + jnp.dot(win, w_ref[idx],                    # bf16 MXU, f32 acc
                                preferred_element_type=jnp.float32)
        o_ref[...] = acc + b_ref[...]           # bias broadcast over rows

    cost = pl.CostEstimate(
        flops=2 * B * OH * OW * KH * KW * C * OUT,
        transcendentals=0,
        bytes_accessed=int(x_flat.size * 4 + wk.size * 2 + bvec.size * 4
                           + B * Mp * Np * 4),
    )

    out = pl.pallas_call(
        kernel,
        out_shape=jax.ShapeDtypeStruct((B, Mp, Np), jnp.float32),
        grid=(B,),
        in_specs=[
            pl.BlockSpec((None, HWp, C), lambda bi: (bi, 0, 0)),      # one image resident
            pl.BlockSpec((KH * KW, C, Np), lambda bi: (0, 0, 0)),     # weight, grid-invariant
            pl.BlockSpec((1, Np), lambda bi: (0, 0)),                 # bias, grid-invariant
        ],
        out_specs=pl.BlockSpec((None, Mp, Np), lambda bi: (bi, 0, 0)),
        compiler_params=pltpu.CompilerParams(
            dimension_semantics=("parallel",),       # batch shards across v7x TCs
            vmem_limit_bytes=32 * 1024 * 1024,
        ),
        cost_estimate=cost,
    )(x_flat, wk, bvec)

    # ---- drop padded rows / lanes and invalid ow >= OW columns, back to NCHW ----
    y = out[:, :OH * W, :OUT].reshape(B, OH, W, OUT)[:, :, :OW, :]
    return jnp.transpose(y, (0, 3, 1, 2))


if __name__ == "__main__":
    key = jax.random.PRNGKey(0)
    k_x, k_w, k_b = jax.random.split(key, 3)

    batch, in_channels, out_channels, kernel_size = 2, 4, 8, 3
    H = W = 16

    x = jax.random.normal(k_x, (batch, in_channels, H, W), dtype=jnp.float32)
    # Mimic nn.Conv2d's uniform(-1/sqrt(fan_in), 1/sqrt(fan_in)) init.
    fan_in = in_channels * kernel_size * kernel_size
    bound = 1.0 / (fan_in ** 0.5)
    w = jax.random.uniform(
        k_w, (out_channels, in_channels, kernel_size, kernel_size),
        dtype=jnp.float32, minval=-bound, maxval=bound)
    b = jax.random.uniform(
        k_b, (out_channels,), dtype=jnp.float32, minval=-bound, maxval=bound)

    out = jax.block_until_ready(conv_model_forward(x, w, b))

    def conv_ref(xx, ww):
        return jax.lax.conv_general_dilated(
            xx, ww, window_strides=(1, 1), padding="VALID",
            dimension_numbers=("NCHW", "OIHW", "NCHW"),
            precision=jax.lax.Precision.HIGHEST)

    # Matched-precision reference: same bf16-rounded operands, f32 accumulation.
    x_q = x.astype(jnp.bfloat16).astype(jnp.float32)
    w_q = w.astype(jnp.bfloat16).astype(jnp.float32)
    ref_q = (conv_ref(x_q, w_q) + b.reshape(1, -1, 1, 1)) * 2.0
    # Full-f32 reference (module semantics); kernel's contract is bf16-in/f32-acc.
    ref_f32 = (conv_ref(x, w) + b.reshape(1, -1, 1, 1)) * 2.0

    assert out.shape == ref_f32.shape, (out.shape, ref_f32.shape)
    assert jnp.allclose(out, ref_q, atol=1e-4, rtol=1e-4), \
        "mismatch vs bf16-matched reference"
    assert jnp.allclose(out, ref_f32, atol=1e-1, rtol=1e-1), \
        "drift vs f32 reference exceeds bf16 accumulation contract"

    print("KERNEL_OK")
</pallas_src>

<mosaic_0001>
module attributes {stable_mosaic.version = 11 : i64} {
  func.func @kernel(%arg0: i32, %arg1: memref<1x264x4xf32, #tpu.memory_space<vmem>>, %arg2: memref<9x4x128xbf16, #tpu.memory_space<vmem>>, %arg3: memref<1x128xf32, #tpu.memory_space<vmem>>, %arg4: memref<1x224x128xf32, #tpu.memory_space<vmem>>) attributes {dimension_semantics = [#tpu.dimension_semantics<parallel>], iteration_bounds = array<i64: 2>, scalar_prefetch = 0 : i64, scratch_operands = 0 : i64, tpu.core_type = #tpu.core_type<tc>, window_params = [{transform_indices = @transform_0, window_bounds = array<i64: 1, 264, 4>}, {pipeline_mode = #tpu.pipeline_mode<synchronous>, transform_indices = @transform_1, window_bounds = array<i64: 9, 4, 128>}, {pipeline_mode = #tpu.pipeline_mode<synchronous>, transform_indices = @transform_2, window_bounds = array<i64: 1, 128>}, {transform_indices = @transform_3, window_bounds = array<i64: 1, 224, 128>}]} {
    %cst = arith.constant 0.000000e+00 : f32
    %0 = vector.broadcast %cst : f32 to vector<224x128xf32>
    %c0 = arith.constant 0 : index
    %c0_0 = arith.constant 0 : index
    %c0_1 = arith.constant 0 : index
    %1 = vector.load %arg1[%c0, %c0_0, %c0_1] : memref<1x264x4xf32, #tpu.memory_space<vmem>>, vector<1x224x4xf32>
    %2 = vector.shape_cast %1 : vector<1x224x4xf32> to vector<224x4xf32>
    %3 = arith.truncf %2 : vector<224x4xf32> to vector<224x4xbf16>
    %c0_2 = arith.constant 0 : index
    %c0_3 = arith.constant 0 : index
    %c0_4 = arith.constant 0 : index
    %4 = vector.load %arg2[%c0_2, %c0_3, %c0_4] : memref<9x4x128xbf16, #tpu.memory_space<vmem>>, vector<1x4x128xbf16>
    %5 = vector.shape_cast %4 : vector<1x4x128xbf16> to vector<4x128xbf16>
    %cst_5 = arith.constant dense<0.000000e+00> : vector<224x128xf32>
    %6 = tpu.matmul %3, %5, %cst_5 {dimension_numbers = #tpu.dot_dimension_numbers<[1], [0], [0], [1], [0, 0, 1, 1], [], []>} : vector<224x4xbf16>, vector<4x128xbf16>, vector<224x128xf32> -> vector<224x128xf32>
    %7 = arith.addf %0, %6 : vector<224x128xf32>
    %c0_6 = arith.constant 0 : index
    %c1 = arith.constant 1 : index
    %c0_7 = arith.constant 0 : index
    %8 = vector.load %arg1[%c0_6, %c1, %c0_7] : memref<1x264x4xf32, #tpu.memory_space<vmem>>, vector<1x224x4xf32>
    %9 = vector.shape_cast %8 : vector<1x224x4xf32> to vector<224x4xf32>
    %10 = arith.truncf %9 : vector<224x4xf32> to vector<224x4xbf16>
    %c1_8 = arith.constant 1 : index
    %c0_9 = arith.constant 0 : index
    %c0_10 = arith.constant 0 : index
    %11 = vector.load %arg2[%c1_8, %c0_9, %c0_10] : memref<9x4x128xbf16, #tpu.memory_space<vmem>>, vector<1x4x128xbf16>
    %12 = vector.shape_cast %11 : vector<1x4x128xbf16> to vector<4x128xbf16>
    %cst_11 = arith.constant dense<0.000000e+00> : vector<224x128xf32>
    %13 = tpu.matmul %10, %12, %cst_11 {dimension_numbers = #tpu.dot_dimension_numbers<[1], [0], [0], [1], [0, 0, 1, 1], [], []>} : vector<224x4xbf16>, vector<4x128xbf16>, vector<224x128xf32> -> vector<224x128xf32>
    %14 = arith.addf %7, %13 : vector<224x128xf32>
    %c0_12 = arith.constant 0 : index
    %c2 = arith.constant 2 : index
    %c0_13 = arith.constant 0 : index
    %15 = vector.load %arg1[%c0_12, %c2, %c0_13] : memref<1x264x4xf32, #tpu.memory_space<vmem>>, vector<1x224x4xf32>
    %16 = vector.shape_cast %15 : vector<1x224x4xf32> to vector<224x4xf32>
    %17 = arith.truncf %16 : vector<224x4xf32> to vector<224x4xbf16>
    %c2_14 = arith.constant 2 : index
    %c0_15 = arith.constant 0 : index
    %c0_16 = arith.constant 0 : index
    %18 = vector.load %arg2[%c2_14, %c0_15, %c0_16] : memref<9x4x128xbf16, #tpu.memory_space<vmem>>, vector<1x4x128xbf16>
    %19 = vector.shape_cast %18 : vector<1x4x128xbf16> to vector<4x128xbf16>
    %cst_17 = arith.constant dense<0.000000e+00> : vector<224x128xf32>
    %20 = tpu.matmul %17, %19, %cst_17 {dimension_numbers = #tpu.dot_dimension_numbers<[1], [0], [0], [1], [0, 0, 1, 1], [], []>} : vector<224x4xbf16>, vector<4x128xbf16>, vector<224x128xf32> -> vector<224x128xf32>
    %21 = arith.addf %14, %20 : vector<224x128xf32>
    %c0_18 = arith.constant 0 : index
    %c16 = arith.constant 16 : index
    %c0_19 = arith.constant 0 : index
    %22 = vector.load %arg1[%c0_18, %c16, %c0_19] : memref<1x264x4xf32, #tpu.memory_space<vmem>>, vector<1x224x4xf32>
    %23 = vector.shape_cast %22 : vector<1x224x4xf32> to vector<224x4xf32>
    %24 = arith.truncf %23 : vector<224x4xf32> to vector<224x4xbf16>
    %c3 = arith.constant 3 : index
    %c0_20 = arith.constant 0 : index
    %c0_21 = arith.constant 0 : index
    %25 = vector.load %arg2[%c3, %c0_20, %c0_21] : memref<9x4x128xbf16, #tpu.memory_space<vmem>>, vector<1x4x128xbf16>
    %26 = vector.shape_cast %25 : vector<1x4x128xbf16> to vector<4x128xbf16>
    %cst_22 = arith.constant dense<0.000000e+00> : vector<224x128xf32>
    %27 = tpu.matmul %24, %26, %cst_22 {dimension_numbers = #tpu.dot_dimension_numbers<[1], [0], [0], [1], [0, 0, 1, 1], [], []>} : vector<224x4xbf16>, vector<4x128xbf16>, vector<224x128xf32> -> vector<224x128xf32>
    %28 = arith.addf %21, %27 : vector<224x128xf32>
    %c0_23 = arith.constant 0 : index
    %c17 = arith.constant 17 : index
    %c0_24 = arith.constant 0 : index
    %29 = vector.load %arg1[%c0_23, %c17, %c0_24] : memref<1x264x4xf32, #tpu.memory_space<vmem>>, vector<1x224x4xf32>
    %30 = vector.shape_cast %29 : vector<1x224x4xf32> to vector<224x4xf32>
    %31 = arith.truncf %30 : vector<224x4xf32> to vector<224x4xbf16>
    %c4 = arith.constant 4 : index
    %c0_25 = arith.constant 0 : index
    %c0_26 = arith.constant 0 : index
    %32 = vector.load %arg2[%c4, %c0_25, %c0_26] : memref<9x4x128xbf16, #tpu.memory_space<vmem>>, vector<1x4x128xbf16>
    %33 = vector.shape_cast %32 : vector<1x4x128xbf16> to vector<4x128xbf16>
    %cst_27 = arith.constant dense<0.000000e+00> : vector<224x128xf32>
    %34 = tpu.matmul %31, %33, %cst_27 {dimension_numbers = #tpu.dot_dimension_numbers<[1], [0], [0], [1], [0, 0, 1, 1], [], []>} : vector<224x4xbf16>, vector<4x128xbf16>, vector<224x128xf32> -> vector<224x128xf32>
    %35 = arith.addf %28, %34 : vector<224x128xf32>
    %c0_28 = arith.constant 0 : index
    %c18 = arith.constant 18 : index
    %c0_29 = arith.constant 0 : index
    %36 = vector.load %arg1[%c0_28, %c18, %c0_29] : memref<1x264x4xf32, #tpu.memory_space<vmem>>, vector<1x224x4xf32>
    %37 = vector.shape_cast %36 : vector<1x224x4xf32> to vector<224x4xf32>
    %38 = arith.truncf %37 : vector<224x4xf32> to vector<224x4xbf16>
    %c5 = arith.constant 5 : index
    %c0_30 = arith.constant 0 : index
    %c0_31 = arith.constant 0 : index
    %39 = vector.load %arg2[%c5, %c0_30, %c0_31] : memref<9x4x128xbf16, #tpu.memory_space<vmem>>, vector<1x4x128xbf16>
    %40 = vector.shape_cast %39 : vector<1x4x128xbf16> to vector<4x128xbf16>
    %cst_32 = arith.constant dense<0.000000e+00> : vector<224x128xf32>
    %41 = tpu.matmul %38, %40, %cst_32 {dimension_numbers = #tpu.dot_dimension_numbers<[1], [0], [0], [1], [0, 0, 1, 1], [], []>} : vector<224x4xbf16>, vector<4x128xbf16>, vector<224x128xf32> -> vector<224x128xf32>
    %42 = arith.addf %35, %41 : vector<224x128xf32>
    %c0_33 = arith.constant 0 : index
    %c32 = arith.constant 32 : index
    %c0_34 = arith.constant 0 : index
    %43 = vector.load %arg1[%c0_33, %c32, %c0_34] : memref<1x264x4xf32, #tpu.memory_space<vmem>>, vector<1x224x4xf32>
    %44 = vector.shape_cast %43 : vector<1x224x4xf32> to vector<224x4xf32>
    %45 = arith.truncf %44 : vector<224x4xf32> to vector<224x4xbf16>
    %c6 = arith.constant 6 : index
    %c0_35 = arith.constant 0 : index
    %c0_36 = arith.constant 0 : index
    %46 = vector.load %arg2[%c6, %c0_35, %c0_36] : memref<9x4x128xbf16, #tpu.memory_space<vmem>>, vector<1x4x128xbf16>
    %47 = vector.shape_cast %46 : vector<1x4x128xbf16> to vector<4x128xbf16>
    %cst_37 = arith.constant dense<0.000000e+00> : vector<224x128xf32>
    %48 = tpu.matmul %45, %47, %cst_37 {dimension_numbers = #tpu.dot_dimension_numbers<[1], [0], [0], [1], [0, 0, 1, 1], [], []>} : vector<224x4xbf16>, vector<4x128xbf16>, vector<224x128xf32> -> vector<224x128xf32>
    %49 = arith.addf %42, %48 : vector<224x128xf32>
    %c0_38 = arith.constant 0 : index
    %c33 = arith.constant 33 : index
    %c0_39 = arith.constant 0 : index
    %50 = vector.load %arg1[%c0_38, %c33, %c0_39] : memref<1x264x4xf32, #tpu.memory_space<vmem>>, vector<1x224x4xf32>
    %51 = vector.shape_cast %50 : vector<1x224x4xf32> to vector<224x4xf32>
    %52 = arith.truncf %51 : vector<224x4xf32> to vector<224x4xbf16>
    %c7 = arith.constant 7 : index
    %c0_40 = arith.constant 0 : index
    %c0_41 = arith.constant 0 : index
    %53 = vector.load %arg2[%c7, %c0_40, %c0_41] : memref<9x4x128xbf16, #tpu.memory_space<vmem>>, vector<1x4x128xbf16>
    %54 = vector.shape_cast %53 : vector<1x4x128xbf16> to vector<4x128xbf16>
    %cst_42 = arith.constant dense<0.000000e+00> : vector<224x128xf32>
    %55 = tpu.matmul %52, %54, %cst_42 {dimension_numbers = #tpu.dot_dimension_numbers<[1], [0], [0], [1], [0, 0, 1, 1], [], []>} : vector<224x4xbf16>, vector<4x128xbf16>, vector<224x128xf32> -> vector<224x128xf32>
    %56 = arith.addf %49, %55 : vector<224x128xf32>
    %c0_43 = arith.constant 0 : index
    %c34 = arith.constant 34 : index
    %c0_44 = arith.constant 0 : index
    %57 = vector.load %arg1[%c0_43, %c34, %c0_44] : memref<1x264x4xf32, #tpu.memory_space<vmem>>, vector<1x224x4xf32>
    %58 = vector.shape_cast %57 : vector<1x224x4xf32> to vector<224x4xf32>
    %59 = arith.truncf %58 : vector<224x4xf32> to vector<224x4xbf16>
    %c8 = arith.constant 8 : index
    %c0_45 = arith.constant 0 : index
    %c0_46 = arith.constant 0 : index
    %60 = vector.load %arg2[%c8, %c0_45, %c0_46] : memref<9x4x128xbf16, #tpu.memory_space<vmem>>, vector<1x4x128xbf16>
    %61 = vector.shape_cast %60 : vector<1x4x128xbf16> to vector<4x128xbf16>
    %cst_47 = arith.constant dense<0.000000e+00> : vector<224x128xf32>
    %62 = tpu.matmul %59, %61, %cst_47 {dimension_numbers = #tpu.dot_dimension_numbers<[1], [0], [0], [1], [0, 0, 1, 1], [], []>} : vector<224x4xbf16>, vector<4x128xbf16>, vector<224x128xf32> -> vector<224x128xf32>
    %63 = arith.addf %56, %62 : vector<224x128xf32>
    %c0_48 = arith.constant 0 : index
    %c0_49 = arith.constant 0 : index
    %64 = vector.load %arg3[%c0_48, %c0_49] : memref<1x128xf32, #tpu.memory_space<vmem>>, vector<1x128xf32>
    %65 = vector.broadcast %64 : vector<1x128xf32> to vector<224x128xf32>
    %66 = arith.addf %63, %65 : vector<224x128xf32>
    %c0_50 = arith.constant 0 : index
    %c0_51 = arith.constant 0 : index
    %c0_52 = arith.constant 0 : index
    %67 = vector.load %arg4[%c0_50, %c0_51, %c0_52] : memref<1x224x128xf32, #tpu.memory_space<vmem>>, vector<1x224x128xf32>
    %68 = vector.shape_cast %67 : vector<1x224x128xf32> to vector<224x128xf32>
    %69 = vector.shape_cast %66 : vector<224x128xf32> to vector<1x224x128xf32>
    tpu.vector_store %arg4[%c0_50, %c0_51, %c0_52], %69 {strides = array<i32>} : memref<1x224x128xf32, #tpu.memory_space<vmem>>, vector<1x224x128xf32>,
    return
  }
  func.func @transform_0(%arg0: i32) -> (i32, i32, i32) {
    %c0_i32 = arith.constant 0 : i32
    %c0_i32_0 = arith.constant 0 : i32
    %c0_i32_1 = arith.constant 0 : i32
    return %arg0, %c0_i32, %c0_i32_0 : i32, i32, i32
  }
  func.func @transform_1(%arg0: i32) -> (i32, i32, i32) {
    %c0_i32 = arith.constant 0 : i32
    %c0_i32_0 = arith.constant 0 : i32
    %c0_i32_1 = arith.constant 0 : i32
    %c0_i32_2 = arith.constant 0 : i32
    return %c0_i32, %c0_i32_0, %c0_i32_1 : i32, i32, i32
  }
  func.func @transform_2(%arg0: i32) -> (i32, i32) {
    %c0_i32 = arith.constant 0 : i32
    %c0_i32_0 = arith.constant 0 : i32
    %c0_i32_1 = arith.constant 0 : i32
    return %c0_i32, %c0_i32_0 : i32, i32
  }
  func.func @transform_3(%arg0: i32) -> (i32, i32, i32) {
    %c0_i32 = arith.constant 0 : i32
    %c0_i32_0 = arith.constant 0 : i32
    %c0_i32_1 = arith.constant 0 : i32
    return %arg0, %c0_i32, %c0_i32_0 : i32, i32, i32
  }
}

</mosaic_0001>

<llo_original>
// kernel: tpu_custom_call.1
$region0: #{tpu_custom_call.1}
  #allocation0 [shape = 'u32[]', space=smem, size = 0x4, offset = 0x4, fixed_abs, tag = 'smem constant byte address 0x4 - core index']
  #allocation1 [shape = 'u32[144,128]{1,0:T(1,128)}', space=vmem, size = 0x12000, scoped, tag = 'internal scratch']
  %s0 = inlined_call_operand.vmem [shape: f32[2,264,4], index: 0, kind: input, shape index: {}]
  %s1 = inlined_call_operand.vmem [shape: bf16[9,4,128], index: 1, kind: input, shape index: {}]
  %s2 = inlined_call_operand.vmem [shape: f32[1,128], index: 2, kind: input, shape index: {}]
  %s3 = inlined_call_operand.hbm [shape: f32[2,224,128], index: 3, kind: output, shape index: {}]
  %s4 = sld [smem:[#allocation0]]
  $region45: #{tpu_custom_call.1} parent=0
    _
  %s6 = ssub.s32 1, %s4
  %s7 = scalar_select 0, %s6, %s4
  $region1: #{tpu_custom_call.1} parent=0
    #allocation2 [shape = 'u8[229376]{0}', space=vmem, size = 0x38000, scoped, tag = 'output window, operand 0']
    #allocation3 [shape = 's32[2]{0}', space=sflag, size = 0x8, scoped, tag = 'scoped memory for tpu_custom_call.1']
    %8 = vsyncpa [#allocation3], 0
    %s9 = scalar_lea.sflag [#allocation3], 1
    %10 = vsyncpa %s9, 0
    loop: start=0, step=1, limit=4
    $region2: #{tpu_custom_call.1} parent=1 // loop_pre_header
      _
    $region3: #{tpu_custom_call.1} parent=1 // loop_header
      %s12 = sphi 0, %s16
      %p13 = scmp.ge.s32.totalorder %s12, 4
      %s22 = sphi 0, %s24
      %s25 = sphi 0, %s22
      %s26 = sphi 0, %s25
      %s42 = sphi 0, %s26
      %s46 = sphi 0, %s46
      %s48 = sphi 0, %s46
      %s49 = sphi 0, %s48
      %s63 = sphi 0, %s49
      %s67 = sphi 0, %s67
      %s69 = sphi 0, %s67
      %s70 = sphi 0, %s69
      %s84 = sphi 0, %s70
      %s90 = sphi 0, %s92
      %s93 = sphi 0, %s90
      %s94 = sphi 0, %s93
      %s110 = sphi 0, %s94
    $region4: #{tpu_custom_call.1} parent=1 // loop_header_branch
      %15 = sbr.rel (%p13) target = $region8
    $region5: #{tpu_custom_call.1} parent=1 // loop_body
      %s17 = ssub.s32 %s12, 1
      %s18 = ssub.s32 %s12, 2
      %s19 = sadd.s32 %s12, 1
      %s20 = ssub.s32 %s12, %s19
      %p21 = scmp.eq.s32.totalorder %s20, 0
      %s23 = sadd.s32 %s22, 1
      %s24 = scalar_select %p21, %s22, %s23
      %p27 = pneg %p21
      %p28 = scmp.eq.s32.totalorder %s12, 1
      %p29 = por %p27, %p28
      %p30 = scmp.ne.s32.totalorder %s22, %s25
      %p31 = scmp.eq.s32.totalorder %s12, 0
      %p32 = por %p30, %p31
      %p33 = scmp.ne.s32.totalorder %s22, %s25
      %p34 = scmp.eq.s32.totalorder %s17, 1
      %p35 = por %p33, %p34
      %p36 = scmp.ne.s32.totalorder %s25, %s26
      %p37 = scmp.eq.s32.totalorder %s17, 0
      %p38 = por %p36, %p37
      %p39 = scmp.ne.s32.totalorder %s25, %s26
      %p40 = scmp.eq.s32.totalorder %s18, 1
      %p41 = por %p39, %p40
      %p43 = scmp.ne.s32.totalorder %s26, %s42
      %p44 = scmp.eq.s32.totalorder %s18, 0
      %p45 = por %p43, %p44
      %s47 = sadd.s32 %s46, 1
      %p50 = scmp.eq.s32.totalorder %s12, 1
      %p51 = scmp.ne.s32.totalorder %s46, %s48
      %p52 = scmp.eq.s32.totalorder %s12, 0
      %p53 = por %p51, %p52
      %p54 = scmp.ne.s32.totalorder %s46, %s48
      %p55 = scmp.eq.s32.totalorder %s17, 1
      %p56 = por %p54, %p55
      %p57 = scmp.ne.s32.totalorder %s48, %s49
      %p58 = scmp.eq.s32.totalorder %s17, 0
      %p59 = por %p57, %p58
      %p60 = scmp.ne.s32.totalorder %s48, %s49
      %p61 = scmp.eq.s32.totalorder %s18, 1
      %p62 = por %p60, %p61
      %p64 = scmp.ne.s32.totalorder %s49, %s63
      %p65 = scmp.eq.s32.totalorder %s18, 0
      %p66 = por %p64, %p65
      %s68 = sadd.s32 %s67, 1
      %p71 = scmp.eq.s32.totalorder %s12, 1
      %p72 = scmp.ne.s32.totalorder %s67, %s69
      %p73 = scmp.eq.s32.totalorder %s12, 0
      %p74 = por %p72, %p73
      %p75 = scmp.ne.s32.totalorder %s67, %s69
      %p76 = scmp.eq.s32.totalorder %s17, 1
      %p77 = por %p75, %p76
      %p78 = scmp.ne.s32.totalorder %s69, %s70
      %p79 = scmp.eq.s32.totalorder %s17, 0
      %p80 = por %p78, %p79
      %p81 = scmp.ne.s32.totalorder %s69, %s70
      %p82 = scmp.eq.s32.totalorder %s18, 1
      %p83 = por %p81, %p82
      %p85 = scmp.ne.s32.totalorder %s70, %s84
      %p86 = scmp.eq.s32.totalorder %s18, 0
      %p87 = por %p85, %p86
      %s88 = ssub.s32 %s12, %s19
      %p89 = scmp.eq.s32.totalorder %s88, 0
      %s91 = sadd.s32 %s90, 1
      %s92 = scalar_select %p89, %s90, %s91
      %p95 = pneg %p89
      %p96 = scmp.eq.s32.totalorder %s12, 1
      %p97 = por %p95, %p96
      %p98 = scmp.ne.s32.totalorder %s90, %s93
      %p99 = scmp.eq.s32.totalorder %s12, 0
      %p100 = por %p98, %p99
      %p101 = scmp.ne.s32.totalorder %s90, %s93
      %p102 = scmp.eq.s32.totalorder %s17, 1
      %p103 = por %p101, %p102
      %p104 = scmp.ne.s32.totalorder %s93, %s94
      %p105 = scmp.eq.s32.totalorder %s17, 0
      %p106 = por %p104, %p105
      %p107 = scmp.ne.s32.totalorder %s93, %s94
      %p108 = scmp.eq.s32.totalorder %s18, 1
      %p109 = por %p107, %p108
      %p111 = scmp.ne.s32.totalorder %s94, %s110
      %p112 = scmp.eq.s32.totalorder %s18, 0
      %p113 = por %p111, %p112
      %p114 = scmp.le.s32.totalorder 1, %s12
      %p115 = scmp.lt.s32.totalorder %s12, 3
      %p116 = pnand %p114, %p115
      %p117 = pneg %p116
      // Predicated region
      $region9: #{tpu_custom_call.1} parent=5 // pred_check
        _
      $region10: #{tpu_custom_call.1} parent=5 // pred_check_branch
        %119 = sbr.rel (%p116) target = $region12
      $region11: #{tpu_custom_call.1} parent=5 // pred_region
        %s120 = ssub.s32 %s12, 1
        // Predicated region
        $region13: #{tpu_custom_call.1} parent=11 // pred_check
          %p121 = pneg %p59
        $region14: #{tpu_custom_call.1} parent=11 // pred_check_branch
          %123 = sbr.rel (%p121) target = $region16
        $region15: #{tpu_custom_call.1} parent=11 // pred_region
          _
        $region16: #{tpu_custom_call.1} parent=11 // pred_fallthru
          _
        // Predicated region
        $region17: #{tpu_custom_call.1} parent=11 // pred_check
          %p124 = pneg %p80
        $region18: #{tpu_custom_call.1} parent=11 // pred_check_branch
          %126 = sbr.rel (%p124) target = $region20
        $region19: #{tpu_custom_call.1} parent=11 // pred_region
          _
        $region20: #{tpu_custom_call.1} parent=11 // pred_fallthru
          _
      $region12: #{tpu_custom_call.1} parent=5 // pred_fallthru
        _
      %p127 = scmp.lt.s32.totalorder %s12, 2
      // Predicated region
      $region21: #{tpu_custom_call.1} parent=5 // pred_check
        %p128 = pneg %p127
      $region22: #{tpu_custom_call.1} parent=5 // pred_check_branch
        %130 = sbr.rel (%p128) target = $region24
      $region23: #{tpu_custom_call.1} parent=5 // pred_region
        // Predicated region
        $region25: #{tpu_custom_call.1} parent=23 // pred_check
          %p131 = pneg %p32
        $region26: #{tpu_custom_call.1} parent=23 // pred_check_branch
          %133 = sbr.rel (%p131) target = $region28
        $region27: #{tpu_custom_call.1} parent=23 // pred_region
          %p134 = scmp.lt.s32.totalorder %s12, 1
          %s135 = scalar_select %p134, %s12, 1
          %s136 = smul.addr %s135, 33
          %s137 = smul.addr %s136, 8
          %s138 = scalar_lea.vmem %s0, %s137
        $region28: #{tpu_custom_call.1} parent=23 // pred_fallthru
          _
      $region24: #{tpu_custom_call.1} parent=5 // pred_fallthru
        _
      %p139 = scmp.le.s32.totalorder 1, %s12
      %p140 = scmp.lt.s32.totalorder %s12, 3
      %p141 = pnand %p139, %p140
      %p142 = pneg %p141
      // Predicated region
      $region29: #{tpu_custom_call.1} parent=5 // pred_check
        _
      $region30: #{tpu_custom_call.1} parent=5 // pred_check_branch
        %144 = sbr.rel (%p141) target = $region32
      $region31: #{tpu_custom_call.1} parent=5 // pred_region
        %s145 = ssub.s32 %s12, 1
        %p146 = scmp.lt.s32.totalorder %s17, 1
        %s147 = scalar_select %p146, %s17, 1
        %s148 = smul.addr %s147, 33
        %s149 = smul.addr %s148, 8
        %s150 = scalar_lea.vmem %s0, %s149
        %p151 = pneg %p38
        %p152 = pneg %p35
        %p153 = pneg %p59
        %p154 = pneg %p56
        %p155 = pneg %p80
        %p156 = pneg %p77
        %p157 = pneg %p106
        %p158 = pneg %p103
        %s159 = sand.u32 %s93, 1
        %s160 = scalar_lea.sflag [#allocation3], %s159
        %s161 = sand.u32 %s93, 1
        %s162 = smul.addr %s161, 224
        %s163 = scalar_lea.vmem [#allocation2], %s162
        %p164 = scmp.lt.s32.totalorder %s17, 1
        %s165 = scalar_select %p164, %s17, 1
        %s166 = smul.addr %s165, 33
        %s167 = smul.addr %s166, 8
        %s168 = scalar_lea.vmem %s0, %s167
        %v170 = vld [vmem:[%s168] sm:$0xff]
        %v171 = vld [vmem:[%s168 + $0x8] sm:$0xff]
        %v172 = vld [vmem:[%s168 + $0x10] sm:$0xff]
        %v173 = vld [vmem:[%s168 + $0x18] sm:$0xff]
        %v174 = vld [vmem:[%s168 + $0x20] sm:$0xff]
        %v175 = vld [vmem:[%s168 + $0x28] sm:$0xff]
        %v176 = vld [vmem:[%s168 + $0x30] sm:$0xff]
        %v177 = vld [vmem:[%s168 + $0x38] sm:$0xff]
        %v178 = vld [vmem:[%s168 + $0x40] sm:$0xff]
        %v179 = vld [vmem:[%s168 + $0x48] sm:$0xff]
        %v180 = vld [vmem:[%s168 + $0x50] sm:$0xff]
        %v181 = vld [vmem:[%s168 + $0x58] sm:$0xff]
        %v182 = vld [vmem:[%s168 + $0x60] sm:$0xff]
        %v183 = vld [vmem:[%s168 + $0x68] sm:$0xff]
        %v184 = vld [vmem:[%s168 + $0x70] sm:$0xff]
        %v185 = vld [vmem:[%s168 + $0x78] sm:$0xff]
        %v186 = vld [vmem:[%s168 + $0x80] sm:$0xff]
        %v187 = vld [vmem:[%s168 + $0x88] sm:$0xff]
        %v188 = vld [vmem:[%s168 + $0x90] sm:$0xff]
        %v189 = vld [vmem:[%s168 + $0x98] sm:$0xff]
        %v190 = vld [vmem:[%s168 + $0xa0] sm:$0xff]
        %v191 = vld [vmem:[%s168 + $0xa8] sm:$0xff]
        %v192 = vld [vmem:[%s168 + $0xb0] sm:$0xff]
        %v193 = vld [vmem:[%s168 + $0xb8] sm:$0xff]
        %v194 = vld [vmem:[%s168 + $0xc0] sm:$0xff]
        %v195 = vld [vmem:[%s168 + $0xc8] sm:$0xff]
        %v196 = vld [vmem:[%s168 + $0xd0] sm:$0xff]
        %v197 = vld [vmem:[%s168 + $0xd8] sm:$0xff]
        %v198 = vpack.c.bf16 %v171, %v170
        %v199 = vpack.c.bf16 %v173, %v172
        %v200 = vpack.c.bf16 %v175, %v174
        %v201 = vpack.c.bf16 %v177, %v176
        %v202 = vpack.c.bf16 %v179, %v178
        %v203 = vpack.c.bf16 %v181, %v180
        %v204 = vpack.c.bf16 %v183, %v182
        %v205 = vpack.c.bf16 %v185, %v184
        %v206 = vpack.c.bf16 %v187, %v186
        %v207 = vpack.c.bf16 %v189, %v188
        %v208 = vpack.c.bf16 %v191, %v190
        %v209 = vpack.c.bf16 %v193, %v192
        %v210 = vpack.c.bf16 %v195, %v194
        %v211 = vpack.c.bf16 %v197, %v196
        %v212 = vld [vmem:[%s1] sm:$0x3]
        %v213 = vld [vmem:[%s168 + $0x1] sm:$0xff]
        %v214 = vld [vmem:[%s168 + $0x9] sm:$0xff]
        %v215 = vld [vmem:[%s168 + $0x11] sm:$0xff]
        %v216 = vld [vmem:[%s168 + $0x19] sm:$0xff]
        %v217 = vld [vmem:[%s168 + $0x21] sm:$0xff]
        %v218 = vld [vmem:[%s168 + $0x29] sm:$0xff]
        %v219 = vld [vmem:[%s168 + $0x31] sm:$0xff]
        %v220 = vld [vmem:[%s168 + $0x39] sm:$0xff]
        %v221 = vld [vmem:[%s168 + $0x41] sm:$0xff]
        %v222 = vld [vmem:[%s168 + $0x49] sm:$0xff]
        %v223 = vld [vmem:[%s168 + $0x51] sm:$0xff]
        %v224 = vld [vmem:[%s168 + $0x59] sm:$0xff]
        %v225 = vld [vmem:[%s168 + $0x61] sm:$0xff]
        %v226 = vld [vmem:[%s168 + $0x69] sm:$0xff]
        %v227 = vld [vmem:[%s168 + $0x71] sm:$0xff]
        %v228 = vld [vmem:[%s168 + $0x79] sm:$0xff]
        %v229 = vld [vmem:[%s168 + $0x81] sm:$0xff]
        %v230 = vld [vmem:[%s168 + $0x89] sm:$0xff]
        %v231 = vld [vmem:[%s168 + $0x91] sm:$0xff]
        %v232 = vld [vmem:[%s168 + $0x99] sm:$0xff]
        %v233 = vld [vmem:[%s168 + $0xa1] sm:$0xff]
        %v234 = vld [vmem:[%s168 + $0xa9] sm:$0xff]
        %v235 = vld [vmem:[%s168 + $0xb1] sm:$0xff]
        %v236 = vld [vmem:[%s168 + $0xb9] sm:$0xff]
        %v237 = vld [vmem:[%s168 + $0xc1] sm:$0xff]
        %v238 = vld [vmem:[%s168 + $0xc9] sm:$0xff]
        %v239 = vld [vmem:[%s168 + $0xd1] sm:$0xff]
        %v240 = vld [vmem:[%s168 + $0xd9] sm:$0xff]
        %v241 = vpack.c.bf16 %v214, %v213
        %v242 = vpack.c.bf16 %v216, %v215
        %v243 = vpack.c.bf16 %v218, %v217
        %v244 = vpack.c.bf16 %v220, %v219
        %v245 = vpack.c.bf16 %v222, %v221
        %v246 = vpack.c.bf16 %v224, %v223
        %v247 = vpack.c.bf16 %v226, %v225
        %v248 = vpack.c.bf16 %v228, %v227
        %v249 = vpack.c.bf16 %v230, %v229
        %v250 = vpack.c.bf16 %v232, %v231
        %v251 = vpack.c.bf16 %v234, %v233
        %v252 = vpack.c.bf16 %v236, %v235
        %v253 = vpack.c.bf16 %v238, %v237
        %v254 = vpack.c.bf16 %v240, %v239
        %s255 = scalar_lea.vmem %s1, 2
        %v256 = vld [vmem:[%s255] sm:$0x3]
        %vm257 = vcmask 31744
        %v259 = vsel %vm257, %v241, 0
        %v262 = vsel %vm257, %v242, 0
        %v265 = vsel %vm257, %v243, 0
        %v268 = vsel %vm257, %v244, 0
        %v271 = vsel %vm257, %v245, 0
        %v274 = vsel %vm257, %v246, 0
        %v277 = vsel %vm257, %v247, 0
        %v280 = vsel %vm257, %v248, 0
        %v283 = vsel %vm257, %v249, 0
        %v286 = vsel %vm257, %v250, 0
        %v289 = vsel %vm257, %v251, 0
        %v292 = vsel %vm257, %v252, 0
        %v295 = vsel %vm257, %v253, 0
        %v298 = vsel %vm257, %v254, 0
        %vm300 = vcmask 1041408
        %v302 = vsel %vm300, %v256, 0
        %304 = vmatprep.subr.bf16.mxu0 0
        %305 = vmatpush1.bf16.msra.mxu0 %v302
        %306 = vmatprep.subr.bf16.mxu0 0
        %307 = vmatpush1.bf16.msra.mxu0 0
        %308 = vmatprep.subr.bf16.mxu0 0
        %309 = vmatpush1.bf16.msra.mxu0 0
        %310 = vmatprep.subr.bf16.mxu0 0
        %311 = vmatpush1.bf16.msra.mxu0 0
        %312 = vmatprep.subr.bf16.mxu0 0
        %313 = vmatpush1.bf16.msra.mxu0 0
        %314 = vmatprep.subr.bf16.mxu0 0
        %315 = vmatpush1.bf16.msra.mxu0 0
        %316 = vmatprep.subr.bf16.mxu0 0
        %317 = vmatpush1.bf16.msra.mxu0 0
        %318 = vmatprep.subr.bf16.mxu0 0
        %319 = vmatpush1.bf16.msra.mxu0 0
        %320 = vmatprep.subr.bf16.mxu0 0
        %321 = vmatpush1.bf16.msra.mxu0 0
        %322 = vmatprep.subr.bf16.mxu0 0
        %323 = vmatpush1.bf16.msra.mxu0 0
        %324 = vmatprep.subr.bf16.mxu0 0
        %325 = vmatpush1.bf16.msra.mxu0 0
        %326 = vmatprep.subr.bf16.mxu0 0
        %327 = vmatpush1.bf16.msra.mxu0 0
        %328 = vmatprep.subr.bf16.mxu0 0
        %329 = vmatpush1.bf16.msra.mxu0 0
        %330 = vmatprep.subr.bf16.mxu0 0
        %331 = vmatpush1.bf16.msra.mxu0 0
        %332 = vmatprep.subr.bf16.mxu0 0
        %333 = vmatpush1.bf16.msra.mxu0 0
        %334 = vmatprep.subr.bf16.mxu0 0
        %335 = vmatpush1.bf16.msra.mxu0 0
        %336 = vmatprep.mubr.bf16.mxu0 0
        %337 = vmatmul.mubr.bf16.gmra.mrb[0].mxu0 %v259
        %v338 = vpop.f32.mrb[0].mxu0
        %v339 = vadd.f32 0.0, %v338
        %v340 = vpop.f32.mrb[0].mxu0
        %v341 = vpop.f32.mrb[0].mxu0
        %v342 = vadd.f32 0.0, %v341
        %v343 = vpop.f32.mrb[0].mxu0
        %344 = vmatprep.mubr.bf16.mxu0 0
        %345 = vmatmul.mubr.bf16.gmra.mrb[0].mxu0 %v262
        %v346 = vpop.f32.mrb[0].mxu0
        %v347 = vadd.f32 0.0, %v346
        %v348 = vpop.f32.mrb[0].mxu0
        %v349 = vpop.f32.mrb[0].mxu0
        %v350 = vadd.f32 0.0, %v349
        %v351 = vpop.f32.mrb[0].mxu0
        %352 = vmatprep.mubr.bf16.mxu0 0
        %353 = vmatmul.mubr.bf16.gmra.mrb[0].mxu0 %v265
        %v354 = vpop.f32.mrb[0].mxu0
        %v355 = vadd.f32 0.0, %v354
        %v356 = vpop.f32.mrb[0].mxu0
        %v357 = vpop.f32.mrb[0].mxu0
        %v358 = vadd.f32 0.0, %v357
        %v359 = vpop.f32.mrb[0].mxu0
        %360 = vmatprep.mubr.bf16.mxu0 0
        %361 = vmatmul.mubr.bf16.gmra.mrb[0].mxu0 %v268
        %v362 = vpop.f32.mrb[0].mxu0
        %v363 = vadd.f32 0.0, %v362
        %v364 = vpop.f32.mrb[0].mxu0
        %v365 = vpop.f32.mrb[0].mxu0
        %v366 = vadd.f32 0.0, %v365
        %v367 = vpop.f32.mrb[0].mxu0
        %368 = vmatprep.mubr.bf16.mxu0 0
        %369 = vmatmul.mubr.bf16.gmra.mrb[0].mxu0 %v271
        %v370 = vpop.f32.mrb[0].mxu0
        %v371 = vadd.f32 0.0, %v370
        %v372 = vpop.f32.mrb[0].mxu0
        %v373 = vpop.f32.mrb[0].mxu0
        %v374 = vadd.f32 0.0, %v373
        %v375 = vpop.f32.mrb[0].mxu0
        %376 = vmatprep.mubr.bf16.mxu0 0
        %377 = vmatmul.mubr.bf16.gmra.mrb[0].mxu0 %v274
        %v378 = vpop.f32.mrb[0].mxu0
        %v379 = vadd.f32 0.0, %v378
        %v380 = vpop.f32.mrb[0].mxu0
        %v381 = vpop.f32.mrb[0].mxu0
        %v382 = vadd.f32 0.0, %v381
        %v383 = vpop.f32.mrb[0].mxu0
        %384 = vmatprep.mubr.bf16.mxu0 0
        %385 = vmatmul.mubr.bf16.gmra.mrb[0].mxu0 %v277
        %v386 = vpop.f32.mrb[0].mxu0
        %v387 = vadd.f32 0.0, %v386
        %v388 = vpop.f32.mrb[0].mxu0
        %v389 = vpop.f32.mrb[0].mxu0
        %v390 = vadd.f32 0.0, %v389
        %v391 = vpop.f32.mrb[0].mxu0
        %392 = vmatprep.mubr.bf16.mxu0 0
        %393 = vmatmul.mubr.bf16.gmra.mrb[0].mxu0 %v280
        %v394 = vpop.f32.mrb[0].mxu0
        %v395 = vadd.f32 0.0, %v394
        %v396 = vpop.f32.mrb[0].mxu0
        %v397 = vpop.f32.mrb[0].mxu0
        %v398 = vadd.f32 0.0, %v397
        %v399 = vpop.f32.mrb[0].mxu0
        %400 = vmatprep.mubr.bf16.mxu0 0
        %401 = vmatmul.mubr.bf16.gmra.mrb[0].mxu0 %v283
        %v402 = vpop.f32.mrb[0].mxu0
        %v403 = vadd.f32 0.0, %v402
        %v404 = vpop.f32.mrb[0].mxu0
        %v405 = vpop.f32.mrb[0].mxu0
        %v406 = vadd.f32 0.0, %v405
        %v407 = vpop.f32.mrb[0].mxu0
        %408 = vmatprep.mubr.bf16.mxu0 0
        %409 = vmatmul.mubr.bf16.gmra.mrb[0].mxu0 %v286
        %v410 = vpop.f32.mrb[0].mxu0
        %v411 = vadd.f32 0.0, %v410
        %v412 = vpop.f32.mrb[0].mxu0
        %v413 = vpop.f32.mrb[0].mxu0
        %v414 = vadd.f32 0.0, %v413
        %v415 = vpop.f32.mrb[0].mxu0
        %416 = vmatprep.mubr.bf16.mxu0 0
        %417 = vmatmul.mubr.bf16.gmra.mrb[0].mxu0 %v289
        %v418 = vpop.f32.mrb[0].mxu0
        %v419 = vadd.f32 0.0, %v418
        %v420 = vpop.f32.mrb[0].mxu0
        %v421 = vpop.f32.mrb[0].mxu0
        %v422 = vadd.f32 0.0, %v421
        %v423 = vpop.f32.mrb[0].mxu0
        %424 = vmatprep.mubr.bf16.mxu0 0
        %425 = vmatmul.mubr.bf16.gmra.mrb[0].mxu0 %v292
        %v426 = vpop.f32.mrb[0].mxu0
        %v427 = vadd.f32 0.0, %v426
        %v428 = vpop.f32.mrb[0].mxu0
        %v429 = vpop.f32.mrb[0].mxu0
        %v430 = vadd.f32 0.0, %v429
        %v431 = vpop.f32.mrb[0].mxu0
        %432 = vmatprep.mubr.bf16.mxu0 0
        %433 = vmatmul.mubr.bf16.gmra.mrb[0].mxu0 %v295
        %v434 = vpop.f32.mrb[0].mxu0
        %v435 = vadd.f32 0.0, %v434
        %v436 = vpop.f32.mrb[0].mxu0
        %v437 = vpop.f32.mrb[0].mxu0
        %v438 = vadd.f32 0.0, %v437
        %v439 = vpop.f32.mrb[0].mxu0
        %440 = vmatprep.mubr.bf16.mxu0 0
        %441 = vmatmul.mubr.bf16.gmra.mrb[0].mxu0 %v298
        %v442 = vpop.f32.mrb[0].mxu0
        %v443 = vadd.f32 0.0, %v442
        %v444 = vpop.f32.mrb[0].mxu0
        %v445 = vpop.f32.mrb[0].mxu0
        %v446 = vadd.f32 0.0, %v445
        %v447 = vpop.f32.mrb[0].mxu0
        %448 = vdwg.mxu0
        %v450 = vsel %vm257, %v198, 0
        %v453 = vsel %vm257, %v199, 0
        %v456 = vsel %vm257, %v200, 0
        %v459 = vsel %vm257, %v201, 0
        %v462 = vsel %vm257, %v202, 0
        %v465 = vsel %vm257, %v203, 0
        %v468 = vsel %vm257, %v204, 0
        %v471 = vsel %vm257, %v205, 0
        %v474 = vsel %vm257, %v206, 0
        %v477 = vsel %vm257, %v207, 0
        %v480 = vsel %vm257, %v208, 0
        %v483 = vsel %vm257, %v209, 0
        %v486 = vsel %vm257, %v210, 0
        %v489 = vsel %vm257, %v211, 0
        %v492 = vsel %vm300, %v212, 0
        %494 = vmatprep.subr.bf16.mxu0 0
        %495 = vmatpush1.bf16.msra.mxu0 %v492
        %496 = vmatprep.subr.bf16.mxu0 0
        %497 = vmatpush1.bf16.msra.mxu0 0
        %498 = vmatprep.subr.bf16.mxu0 0
        %499 = vmatpush1.bf16.msra.mxu0 0
        %500 = vmatprep.subr.bf16.mxu0 0
        %501 = vmatpush1.bf16.msra.mxu0 0
        %502 = vmatprep.subr.bf16.mxu0 0
        %503 = vmatpush1.bf16.msra.mxu0 0
        %504 = vmatprep.subr.bf16.mxu0 0
        %505 = vmatpush1.bf16.msra.mxu0 0
        %506 = vmatprep.subr.bf16.mxu0 0
        %507 = vmatpush1.bf16.msra.mxu0 0
        %508 = vmatprep.subr.bf16.mxu0 0
        %509 = vmatpush1.bf16.msra.mxu0 0
        %510 = vmatprep.subr.bf16.mxu0 0
        %511 = vmatpush1.bf16.msra.mxu0 0
        %512 = vmatprep.subr.bf16.mxu0 0
        %513 = vmatpush1.bf16.msra.mxu0 0
        %514 = vmatprep.subr.bf16.mxu0 0
        %515 = vmatpush1.bf16.msra.mxu0 0
        %516 = vmatprep.subr.bf16.mxu0 0
        %517 = vmatpush1.bf16.msra.mxu0 0
        %518 = vmatprep.subr.bf16.mxu0 0
        %519 = vmatpush1.bf16.msra.mxu0 0
        %520 = vmatprep.subr.bf16.mxu0 0
        %521 = vmatpush1.bf16.msra.mxu0 0
        %522 = vmatprep.subr.bf16.mxu0 0
        %523 = vmatpush1.bf16.msra.mxu0 0
        %524 = vmatprep.subr.bf16.mxu0 0
        %525 = vmatpush1.bf16.msra.mxu0 0
        %526 = vmatprep.mubr.bf16.mxu0 0
        %527 = vmatmul.mubr.bf16.gmra.mrb[0].mxu0 %v450
        %v528 = vpop.f32.mrb[0].mxu0
        %v529 = vadd.f32 %v339, %v528
        %v530 = vpop.f32.mrb[0].mxu0
        %v531 = vpop.f32.mrb[0].mxu0
        %v532 = vadd.f32 %v342, %v531
        %v533 = vpop.f32.mrb[0].mxu0
        %534 = vmatprep.mubr.bf16.mxu0 0
        %535 = vmatmul.mubr.bf16.gmra.mrb[0].mxu0 %v453
        %v536 = vpop.f32.mrb[0].mxu0
        %v537 = vadd.f32 %v347, %v536
        %v538 = vpop.f32.mrb[0].mxu0
        %v539 = vpop.f32.mrb[0].mxu0
        %v540 = vadd.f32 %v350, %v539
        %v541 = vpop.f32.mrb[0].mxu0
        %542 = vmatprep.mubr.bf16.mxu0 0
        %543 = vmatmul.mubr.bf16.gmra.mrb[0].mxu0 %v456
        %v544 = vpop.f32.mrb[0].mxu0
        %v545 = vadd.f32 %v355, %v544
        %v546 = vpop.f32.mrb[0].mxu0
        %v547 = vpop.f32.mrb[0].mxu0
        %v548 = vadd.f32 %v358, %v547
        %v549 = vpop.f32.mrb[0].mxu0
        %550 = vmatprep.mubr.bf16.mxu0 0
        %551 = vmatmul.mubr.bf16.gmra.mrb[0].mxu0 %v459
        %v552 = vpop.f32.mrb[0].mxu0
        %v553 = vadd.f32 %v363, %v552
        %v554 = vpop.f32.mrb[0].mxu0
        %v555 = vpop.f32.mrb[0].mxu0
        %v556 = vadd.f32 %v366, %v555
        %v557 = vpop.f32.mrb[0].mxu0
        %558 = vmatprep.mubr.bf16.mxu0 0
        %559 = vmatmul.mubr.bf16.gmra.mrb[0].mxu0 %v462
        %v560 = vpop.f32.mrb[0].mxu0
        %v561 = vadd.f32 %v371, %v560
        %v562 = vpop.f32.mrb[0].mxu0
        %v563 = vpop.f32.mrb[0].mxu0
        %v564 = vadd.f32 %v374, %v563
        %v565 = vpop.f32.mrb[0].mxu0
        %566 = vmatprep.mubr.bf16.mxu0 0
        %567 = vmatmul.mubr.bf16.gmra.mrb[0].mxu0 %v465
        %v568 = vpop.f32.mrb[0].mxu0
        %v569 = vadd.f32 %v379, %v568
        %v570 = vpop.f32.mrb[0].mxu0
        %v571 = vpop.f32.mrb[0].mxu0
        %v572 = vadd.f32 %v382, %v571
        %v573 = vpop.f32.mrb[0].mxu0
        %574 = vmatprep.mubr.bf16.mxu0 0
        %575 = vmatmul.mubr.bf16.gmra.mrb[0].mxu0 %v468
        %v576 = vpop.f32.mrb[0].mxu0
        %v577 = vadd.f32 %v387, %v576
        %v578 = vpop.f32.mrb[0].mxu0
        %v579 = vpop.f32.mrb[0].mxu0
        %v580 = vadd.f32 %v390, %v579
        %v581 = vpop.f32.mrb[0].mxu0
        %582 = vmatprep.mubr.bf16.mxu0 0
        %583 = vmatmul.mubr.bf16.gmra.mrb[0].mxu0 %v471
        %v584 = vpop.f32.mrb[0].mxu0
        %v585 = vadd.f32 %v395, %v584
        %v586 = vpop.f32.mrb[0].mxu0
        %v587 = vpop.f32.mrb[0].mxu0
        %v588 = vadd.f32 %v398, %v587
        %v589 = vpop.f32.mrb[0].mxu0
        %590 = vmatprep.mubr.bf16.mxu0 0
        %591 = vmatmul.mubr.bf16.gmra.mrb[0].mxu0 %v474
        %v592 = vpop.f32.mrb[0].mxu0
        %v593 = vadd.f32 %v403, %v592
        %v594 = vpop.f32.mrb[0].mxu0
        %v595 = vpop.f32.mrb[0].mxu0
        %v596 = vadd.f32 %v406, %v595
        %v597 = vpop.f32.mrb[0].mxu0
        %598 = vmatprep.mubr.bf16.mxu0 0
        %599 = vmatmul.mubr.bf16.gmra.mrb[0].mxu0 %v477
        %v600 = vpop.f32.mrb[0].mxu0
        %v601 = vadd.f32 %v411, %v600
        %v602 = vpop.f32.mrb[0].mxu0
        %v603 = vpop.f32.mrb[0].mxu0
        %v604 = vadd.f32 %v414, %v603
        %v605 = vpop.f32.mrb[0].mxu0
        %606 = vmatprep.mubr.bf16.mxu0 0
        %607 = vmatmul.mubr.bf16.gmra.mrb[0].mxu0 %v480
        %v608 = vpop.f32.mrb[0].mxu0
        %v609 = vadd.f32 %v419, %v608
        %v610 = vpop.f32.mrb[0].mxu0
        %v611 = vpop.f32.mrb[0].mxu0
        %v612 = vadd.f32 %v422, %v611
        %v613 = vpop.f32.mrb[0].mxu0
        %614 = vmatprep.mubr.bf16.mxu0 0
        %615 = vmatmul.mubr.bf16.gmra.mrb[0].mxu0 %v483
        %v616 = vpop.f32.mrb[0].mxu0
        %v617 = vadd.f32 %v427, %v616
        %v618 = vpop.f32.mrb[0].mxu0
        %v619 = vpop.f32.mrb[0].mxu0
        %v620 = vadd.f32 %v430, %v619
        %v621 = vpop.f32.mrb[0].mxu0
        %622 = vmatprep.mubr.bf16.mxu0 0
        %623 = vmatmul.mubr.bf16.gmra.mrb[0].mxu0 %v486
        %v624 = vpop.f32.mrb[0].mxu0
        %v625 = vadd.f32 %v435, %v624
        %v626 = vpop.f32.mrb[0].mxu0
        %v627 = vpop.f32.mrb[0].mxu0
        %v628 = vadd.f32 %v438, %v627
        %v629 = vpop.f32.mrb[0].mxu0
        %630 = vmatprep.mubr.bf16.mxu0 0
        %631 = vmatmul.mubr.bf16.gmra.mrb[0].mxu0 %v489
        %v632 = vpop.f32.mrb[0].mxu0
        %v633 = vadd.f32 %v443, %v632
        %v634 = vpop.f32.mrb[0].mxu0
        %v635 = vpop.f32.mrb[0].mxu0
        %v636 = vadd.f32 %v446, %v635
        %v637 = vpop.f32.mrb[0].mxu0
        %638 = vdwg.mxu0
        %v639 = vld [vmem:[%s168 + $0x2] sm:$0xff]
        %v640 = vld [vmem:[%s168 + $0xa] sm:$0xff]
        %v641 = vld [vmem:[%s168 + $0x12] sm:$0xff]
        %v642 = vld [vmem:[%s168 + $0x1a] sm:$0xff]
        %v643 = vld [vmem:[%s168 + $0x22] sm:$0xff]
        %v644 = vld [vmem:[%s168 + $0x2a] sm:$0xff]
        %v645 = vld [vmem:[%s168 + $0x32] sm:$0xff]
        %v646 = vld [vmem:[%s168 + $0x3a] sm:$0xff]
        %v647 = vld [vmem:[%s168 + $0x42] sm:$0xff]
        %v648 = vld [vmem:[%s168 + $0x4a] sm:$0xff]
        %v649 = vld [vmem:[%s168 + $0x52] sm:$0xff]
        %v650 = vld [vmem:[%s168 + $0x5a] sm:$0xff]
        %v651 = vld [vmem:[%s168 + $0x62] sm:$0xff]
        %v652 = vld [vmem:[%s168 + $0x6a] sm:$0xff]
        %v653 = vld [vmem:[%s168 + $0x72] sm:$0xff]
        %v654 = vld [vmem:[%s168 + $0x7a] sm:$0xff]
        %v655 = vld [vmem:[%s168 + $0x82] sm:$0xff]
        %v656 = vld [vmem:[%s168 + $0x8a] sm:$0xff]
        %v657 = vld [vmem:[%s168 + $0x92] sm:$0xff]
        %v658 = vld [vmem:[%s168 + $0x9a] sm:$0xff]
        %v659 = vld [vmem:[%s168 + $0xa2] sm:$0xff]
        %v660 = vld [vmem:[%s168 + $0xaa] sm:$0xff]
        %v661 = vld [vmem:[%s168 + $0xb2] sm:$0xff]
        %v662 = vld [vmem:[%s168 + $0xba] sm:$0xff]
        %v663 = vld [vmem:[%s168 + $0xc2] sm:$0xff]
        %v664 = vld [vmem:[%s168 + $0xca] sm:$0xff]
        %v665 = vld [vmem:[%s168 + $0xd2] sm:$0xff]
        %v666 = vld [vmem:[%s168 + $0xda] sm:$0xff]
        %v667 = vpack.c.bf16 %v640, %v639
        %v668 = vpack.c.bf16 %v642, %v641
        %v669 = vpack.c.bf16 %v644, %v643
        %v670 = vpack.c.bf16 %v646, %v645
        %v671 = vpack.c.bf16 %v648, %v647
        %v672 = vpack.c.bf16 %v650, %v649
        %v673 = vpack.c.bf16 %v652, %v651
        %v674 = vpack.c.bf16 %v654, %v653
        %v675 = vpack.c.bf16 %v656, %v655
        %v676 = vpack.c.bf16 %v658, %v657
        %v677 = vpack.c.bf16 %v660, %v659
        %v678 = vpack.c.bf16 %v662, %v661
        %v679 = vpack.c.bf16 %v664, %v663
        %v680 = vpack.c.bf16 %v666, %v665
        %s681 = scalar_lea.vmem %s1, 4
        %v682 = vld [vmem:[%s681] sm:$0x3]
        %v684 = vsel %vm257, %v667, 0
        %v687 = vsel %vm257, %v668, 0
        %v690 = vsel %vm257, %v669, 0
        %v693 = vsel %vm257, %v670, 0
        %v696 = vsel %vm257, %v671, 0
        %v699 = vsel %vm257, %v672, 0
        %v702 = vsel %vm257, %v673, 0
        %v705 = vsel %vm257, %v674, 0
        %v708 = vsel %vm257, %v675, 0
        %v711 = vsel %vm257, %v676, 0
        %v714 = vsel %vm257, %v677, 0
        %v717 = vsel %vm257, %v678, 0
        %v720 = vsel %vm257, %v679, 0
        %v723 = vsel %vm257, %v680, 0
        %v726 = vsel %vm300, %v682, 0
        %728 = vmatprep.subr.bf16.mxu0 0
        %729 = vmatpush1.bf16.msra.mxu0 %v726
        %730 = vmatprep.subr.bf16.mxu0 0
        %731 = vmatpush1.bf16.msra.mxu0 0
        %732 = vmatprep.subr.bf16.mxu0 0
        %733 = vmatpush1.bf16.msra.mxu0 0
        %734 = vmatprep.subr.bf16.mxu0 0
        %735 = vmatpush1.bf16.msra.mxu0 0
        %736 = vmatprep.subr.bf16.mxu0 0
        %737 = vmatpush1.bf16.msra.mxu0 0
        %738 = vmatprep.subr.bf16.mxu0 0
        %739 = vmatpush1.bf16.msra.mxu0 0
        %740 = vmatprep.subr.bf16.mxu0 0
        %741 = vmatpush1.bf16.msra.mxu0 0
        %742 = vmatprep.subr.bf16.mxu0 0
        %743 = vmatpush1.bf16.msra.mxu0 0
        %744 = vmatprep.subr.bf16.mxu0 0
        %745 = vmatpush1.bf16.msra.mxu0 0
        %746 = vmatprep.subr.bf16.mxu0 0
        %747 = vmatpush1.bf16.msra.mxu0 0
        %748 = vmatprep.subr.bf16.mxu0 0
        %749 = vmatpush1.bf16.msra.mxu0 0
        %750 = vmatprep.subr.bf16.mxu0 0
        %751 = vmatpush1.bf16.msra.mxu0 0
        %752 = vmatprep.subr.bf16.mxu0 0
        %753 = vmatpush1.bf16.msra.mxu0 0
        %754 = vmatprep.subr.bf16.mxu0 0
        %755 = vmatpush1.bf16.msra.mxu0 0
        %756 = vmatprep.subr.bf16.mxu0 0
        %757 = vmatpush1.bf16.msra.mxu0 0
        %758 = vmatprep.subr.bf16.mxu0 0
        %759 = vmatpush1.bf16.msra.mxu0 0
        %760 = vmatprep.mubr.bf16.mxu0 0
        %761 = vmatmul.mubr.bf16.gmra.mrb[0].mxu0 %v684
        %v762 = vpop.f32.mrb[0].mxu0
        %v763 = vadd.f32 0.0, %v762
        %v764 = vpop.f32.mrb[0].mxu0
        %v765 = vpop.f32.mrb[0].mxu0
        %v766 = vadd.f32 0.0, %v765
        %v767 = vpop.f32.mrb[0].mxu0
        %768 = vmatprep.mubr.bf16.mxu0 0
        %769 = vmatmul.mubr.bf16.gmra.mrb[0].mxu0 %v687
        %v770 = vpop.f32.mrb[0].mxu0
        %v771 = vadd.f32 0.0, %v770
        %v772 = vpop.f32.mrb[0].mxu0
        %v773 = vpop.f32.mrb[0].mxu0
        %v774 = vadd.f32 0.0, %v773
        %v775 = vpop.f32.mrb[0].mxu0
        %776 = vmatprep.mubr.bf16.mxu0 0
        %777 = vmatmul.mubr.bf16.gmra.mrb[0].mxu0 %v690
        %v778 = vpop.f32.mrb[0].mxu0
        %v779 = vadd.f32 0.0, %v778
        %v780 = vpop.f32.mrb[0].mxu0
        %v781 = vpop.f32.mrb[0].mxu0
        %v782 = vadd.f32 0.0, %v781
        %v783 = vpop.f32.mrb[0].mxu0
        %784 = vmatprep.mubr.bf16.mxu0 0
        %785 = vmatmul.mubr.bf16.gmra.mrb[0].mxu0 %v693
        %v786 = vpop.f32.mrb[0].mxu0
        %v787 = vadd.f32 0.0, %v786
        %v788 = vpop.f32.mrb[0].mxu0
        %v789 = vpop.f32.mrb[0].mxu0
        %v790 = vadd.f32 0.0, %v789
        %v791 = vpop.f32.mrb[0].mxu0
        %792 = vmatprep.mubr.bf16.mxu0 0
        %793 = vmatmul.mubr.bf16.gmra.mrb[0].mxu0 %v696
        %v794 = vpop.f32.mrb[0].mxu0
        %v795 = vadd.f32 0.0, %v794
        %v796 = vpop.f32.mrb[0].mxu0
        %v797 = vpop.f32.mrb[0].mxu0
        %v798 = vadd.f32 0.0, %v797
        %v799 = vpop.f32.mrb[0].mxu0
        %800 = vmatprep.mubr.bf16.mxu0 0
        %801 = vmatmul.mubr.bf16.gmra.mrb[0].mxu0 %v699
        %v802 = vpop.f32.mrb[0].mxu0
        %v803 = vadd.f32 0.0, %v802
        %v804 = vpop.f32.mrb[0].mxu0
        %v805 = vpop.f32.mrb[0].mxu0
        %v806 = vadd.f32 0.0, %v805
        %v807 = vpop.f32.mrb[0].mxu0
        %808 = vmatprep.mubr.bf16.mxu0 0
        %809 = vmatmul.mubr.bf16.gmra.mrb[0].mxu0 %v702
        %v810 = vpop.f32.mrb[0].mxu0
        %v811 = vadd.f32 0.0, %v810
        %v812 = vpop.f32.mrb[0].mxu0
        %v813 = vpop.f32.mrb[0].mxu0
        %v814 = vadd.f32 0.0, %v813
        %v815 = vpop.f32.mrb[0].mxu0
        %816 = vmatprep.mubr.bf16.mxu0 0
        %817 = vmatmul.mubr.bf16.gmra.mrb[0].mxu0 %v705
        %v818 = vpop.f32.mrb[0].mxu0
        %v819 = vadd.f32 0.0, %v818
        %v820 = vpop.f32.mrb[0].mxu0
        %v821 = vpop.f32.mrb[0].mxu0
        %v822 = vadd.f32 0.0, %v821
        %v823 = vpop.f32.mrb[0].mxu0
        %824 = vmatprep.mubr.bf16.mxu0 0
        %825 = vmatmul.mubr.bf16.gmra.mrb[0].mxu0 %v708
        %v826 = vpop.f32.mrb[0].mxu0
        %v827 = vadd.f32 0.0, %v826
        %v828 = vpop.f32.mrb[0].mxu0
        %v829 = vpop.f32.mrb[0].mxu0
        %v830 = vadd.f32 0.0, %v829
        %v831 = vpop.f32.mrb[0].mxu0
        %832 = vmatprep.mubr.bf16.mxu0 0
        %833 = vmatmul.mubr.bf16.gmra.mrb[0].mxu0 %v711
        %v834 = vpop.f32.mrb[0].mxu0
        %v835 = vadd.f32 0.0, %v834
        %v836 = vpop.f32.mrb[0].mxu0
        %v837 = vpop.f32.mrb[0].mxu0
        %v838 = vadd.f32 0.0, %v837
        %v839 = vpop.f32.mrb[0].mxu0
        %840 = vmatprep.mubr.bf16.mxu0 0
        %841 = vmatmul.mubr.bf16.gmra.mrb[0].mxu0 %v714
        %v842 = vpop.f32.mrb[0].mxu0
        %v843 = vadd.f32 0.0, %v842
        %v844 = vpop.f32.mrb[0].mxu0
        %v845 = vpop.f32.mrb[0].mxu0
        %v846 = vadd.f32 0.0, %v845
        %v847 = vpop.f32.mrb[0].mxu0
        %848 = vmatprep.mubr.bf16.mxu0 0
        %849 = vmatmul.mubr.bf16.gmra.mrb[0].mxu0 %v717
        %v850 = vpop.f32.mrb[0].mxu0
        %v851 = vadd.f32 0.0, %v850
        %v852 = vpop.f32.mrb[0].mxu0
        %v853 = vpop.f32.mrb[0].mxu0
        %v854 = vadd.f32 0.0, %v853
        %v855 = vpop.f32.mrb[0].mxu0
        %856 = vmatprep.mubr.bf16.mxu0 0
        %857 = vmatmul.mubr.bf16.gmra.mrb[0].mxu0 %v720
        %v858 = vpop.f32.mrb[0].mxu0
        %v859 = vadd.f32 0.0, %v858
        %v860 = vpop.f32.mrb[0].mxu0
        %v861 = vpop.f32.mrb[0].mxu0
        %v862 = vadd.f32 0.0, %v861
        %v863 = vpop.f32.mrb[0].mxu0
        %864 = vmatprep.mubr.bf16.mxu0 0
        %865 = vmatmul.mubr.bf16.gmra.mrb[0].mxu0 %v723
        %v866 = vpop.f32.mrb[0].mxu0
        %v867 = vadd.f32 0.0, %v866
        %v868 = vpop.f32.mrb[0].mxu0
        %v869 = vpop.f32.mrb[0].mxu0
        %v870 = vadd.f32 0.0, %v869
        %v871 = vpop.f32.mrb[0].mxu0
        %872 = vdwg.mxu0
        %v873 = vadd.f32 %v529, %v763
        %v874 = vadd.f32 %v532, %v766
        %v875 = vadd.f32 %v537, %v771
        %v876 = vadd.f32 %v540, %v774
        %v877 = vadd.f32 %v545, %v779
        %v878 = vadd.f32 %v548, %v782
        %v879 = vadd.f32 %v553, %v787
        %v880 = vadd.f32 %v556, %v790
        %v881 = vadd.f32 %v561, %v795
        %v882 = vadd.f32 %v564, %v798
        %v883 = vadd.f32 %v569, %v803
        %v884 = vadd.f32 %v572, %v806
        %v885 = vadd.f32 %v577, %v811
        %v886 = vadd.f32 %v580, %v814
        %v887 = vadd.f32 %v585, %v819
        %v888 = vadd.f32 %v588, %v822
        %v889 = vadd.f32 %v593, %v827
        %v890 = vadd.f32 %v596, %v830
        %v891 = vadd.f32 %v601, %v835
        %v892 = vadd.f32 %v604, %v838
        %v893 = vadd.f32 %v609, %v843
        %v894 = vadd.f32 %v612, %v846
        %v895 = vadd.f32 %v617, %v851
        %v896 = vadd.f32 %v620, %v854
        %v897 = vadd.f32 %v625, %v859
        %v898 = vadd.f32 %v628, %v862
        %v899 = vadd.f32 %v633, %v867
        %v900 = vadd.f32 %v636, %v870
        %v901 = vld [vmem:[%s168 + $0x10] sm:$0xff]
        %v902 = vld [vmem:[%s168 + $0x18] sm:$0xff]
        %v903 = vld [vmem:[%s168 + $0x20] sm:$0xff]
        %v904 = vld [vmem:[%s168 + $0x28] sm:$0xff]
        %v905 = vld [vmem:[%s168 + $0x30] sm:$0xff]
        %v906 = vld [vmem:[%s168 + $0x38] sm:$0xff]
        %v907 = vld [vmem:[%s168 + $0x40] sm:$0xff]
        %v908 = vld [vmem:[%s168 + $0x48] sm:$0xff]
        %v909 = vld [vmem:[%s168 + $0x50] sm:$0xff]
        %v910 = vld [vmem:[%s168 + $0x58] sm:$0xff]
        %v911 = vld [vmem:[%s168 + $0x60] sm:$0xff]
        %v912 = vld [vmem:[%s168 + $0x68] sm:$0xff]
        %v913 = vld [vmem:[%s168 + $0x70] sm:$0xff]
        %v914 = vld [vmem:[%s168 + $0x78] sm:$0xff]
        %v915 = vld [vmem:[%s168 + $0x80] sm:$0xff]
        %v916 = vld [vmem:[%s168 + $0x88] sm:$0xff]
        %v917 = vld [vmem:[%s168 + $0x90] sm:$0xff]
        %v918 = vld [vmem:[%s168 + $0x98] sm:$0xff]
        %v919 = vld [vmem:[%s168 + $0xa0] sm:$0xff]
        %v920 = vld [vmem:[%s168 + $0xa8] sm:$0xff]
        %v921 = vld [vmem:[%s168 + $0xb0] sm:$0xff]
        %v922 = vld [vmem:[%s168 + $0xb8] sm:$0xff]
        %v923 = vld [vmem:[%s168 + $0xc0] sm:$0xff]
        %v924 = vld [vmem:[%s168 + $0xc8] sm:$0xff]
        %v925 = vld [vmem:[%s168 + $0xd0] sm:$0xff]
        %v926 = vld [vmem:[%s168 + $0xd8] sm:$0xff]
        %v927 = vld [vmem:[%s168 + $0xe0] sm:$0xff]
        %v928 = vld [vmem:[%s168 + $0xe8] sm:$0xff]
        %v929 = vpack.c.bf16 %v902, %v901
        %v930 = vpack.c.bf16 %v904, %v903
        %v931 = vpack.c.bf16 %v906, %v905
        %v932 = vpack.c.bf16 %v908, %v907
        %v933 = vpack.c.bf16 %v910, %v909
        %v934 = vpack.c.bf16 %v912, %v911
        %v935 = vpack.c.bf16 %v914, %v913
        %v936 = vpack.c.bf16 %v916, %v915
        %v937 = vpack.c.bf16 %v918, %v917
        %v938 = vpack.c.bf16 %v920, %v919
        %v939 = vpack.c.bf16 %v922, %v921
        %v940 = vpack.c.bf16 %v924, %v923
        %v941 = vpack.c.bf16 %v926, %v925
        %v942 = vpack.c.bf16 %v928, %v927
        %s943 = scalar_lea.vmem %s1, 6
        %v944 = vld [vmem:[%s943] sm:$0x3]
        %v946 = vsel %vm257, %v929, 0
        %v949 = vsel %vm257, %v930, 0
        %v952 = vsel %vm257, %v931, 0
        %v955 = vsel %vm257, %v932, 0
        %v958 = vsel %vm257, %v933, 0
        %v961 = vsel %vm257, %v934, 0
        %v964 = vsel %vm257, %v935, 0
        %v967 = vsel %vm257, %v936, 0
        %v970 = vsel %vm257, %v937, 0
        %v973 = vsel %vm257, %v938, 0
        %v976 = vsel %vm257, %v939, 0
        %v979 = vsel %vm257, %v940, 0
        %v982 = vsel %vm257, %v941, 0
        %v985 = vsel %vm257, %v942, 0
        %v988 = vsel %vm300, %v944, 0
        %990 = vmatprep.subr.bf16.mxu0 0
        %991 = vmatpush1.bf16.msra.mxu0 %v988
        %992 = vmatprep.subr.bf16.mxu0 0
        %993 = vmatpush1.bf16.msra.mxu0 0
        %994 = vmatprep.subr.bf16.mxu0 0
        %995 = vmatpush1.bf16.msra.mxu0 0
        %996 = vmatprep.subr.bf16.mxu0 0
        %997 = vmatpush1.bf16.msra.mxu0 0
        %998 = vmatprep.subr.bf16.mxu0 0
        %999 = vmatpush1.bf16.msra.mxu0 0
        %1000 = vmatprep.subr.bf16.mxu0 0
        %1001 = vmatpush1.bf16.msra.mxu0 0
        %1002 = vmatprep.subr.bf16.mxu0 0
        %1003 = vmatpush1.bf16.msra.mxu0 0
        %1004 = vmatprep.subr.bf16.mxu0 0
        %1005 = vmatpush1.bf16.msra.mxu0 0
        %1006 = vmatprep.subr.bf16.mxu0 0
        %1007 = vmatpush1.bf16.msra.mxu0 0
        %1008 = vmatprep.subr.bf16.mxu0 0
        %1009 = vmatpush1.bf16.msra.mxu0 0
        %1010 = vmatprep.subr.bf16.mxu0 0
        %1011 = vmatpush1.bf16.msra.mxu0 0
        %1012 = vmatprep.subr.bf16.mxu0 0
        %1013 = vmatpush1.bf16.msra.mxu0 0
        %1014 = vmatprep.subr.bf16.mxu0 0
        %1015 = vmatpush1.bf16.msra.mxu0 0
        %1016 = vmatprep.subr.bf16.mxu0 0
        %1017 = vmatpush1.bf16.msra.mxu0 0
        %1018 = vmatprep.subr.bf16.mxu0 0
        %1019 = vmatpush1.bf16.msra.mxu0 0
        %1020 = vmatprep.subr.bf16.mxu0 0
        %1021 = vmatpush1.bf16.msra.mxu0 0
        %1022 = vmatprep.mubr.bf16.mxu0 0
        %1023 = vmatmul.mubr.bf16.gmra.mrb[0].mxu0 %v946
        %v1024 = vpop.f32.mrb[0].mxu0
        %v1025 = vadd.f32 0.0, %v1024
        %v1026 = vpop.f32.mrb[0].mxu0
        %v1027 = vpop.f32.mrb[0].mxu0
        %v1028 = vadd.f32 0.0, %v1027
        %v1029 = vpop.f32.mrb[0].mxu0
        %1030 = vmatprep.mubr.bf16.mxu0 0
        %1031 = vmatmul.mubr.bf16.gmra.mrb[0].mxu0 %v949
        %v1032 = vpop.f32.mrb[0].mxu0
        %v1033 = vadd.f32 0.0, %v1032
        %v1034 = vpop.f32.mrb[0].mxu0
        %v1035 = vpop.f32.mrb[0].mxu0
        %v1036 = vadd.f32 0.0, %v1035
        %v1037 = vpop.f32.mrb[0].mxu0
        %1038 = vmatprep.mubr.bf16.mxu0 0
        %1039 = vmatmul.mubr.bf16.gmra.mrb[0].mxu0 %v952
        %v1040 = vpop.f32.mrb[0].mxu0
        %v1041 = vadd.f32 0.0, %v1040
        %v1042 = vpop.f32.mrb[0].mxu0
        %v1043 = vpop.f32.mrb[0].mxu0
        %v1044 = vadd.f32 0.0, %v1043
        %v1045 = vpop.f32.mrb[0].mxu0
        %1046 = vmatprep.mubr.bf16.mxu0 0
        %1047 = vmatmul.mubr.bf16.gmra.mrb[0].mxu0 %v955
        %v1048 = vpop.f32.mrb[0].mxu0
        %v1049 = vadd.f32 0.0, %v1048
        %v1050 = vpop.f32.mrb[0].mxu0
        %v1051 = vpop.f32.mrb[0].mxu0
        %v1052 = vadd.f32 0.0, %v1051
        %v1053 = vpop.f32.mrb[0].mxu0
        %1054 = vmatprep.mubr.bf16.mxu0 0
        %1055 = vmatmul.mubr.bf16.gmra.mrb[0].mxu0 %v958
        %v1056 = vpop.f32.mrb[0].mxu0
        %v1057 = vadd.f32 0.0, %v1056
        %v1058 = vpop.f32.mrb[0].mxu0
        %v1059 = vpop.f32.mrb[0].mxu0
        %v1060 = vadd.f32 0.0, %v1059
        %v1061 = vpop.f32.mrb[0].mxu0
        %1062 = vmatprep.mubr.bf16.mxu0 0
        %1063 = vmatmul.mubr.bf16.gmra.mrb[0].mxu0 %v961
        %v1064 = vpop.f32.mrb[0].mxu0
        %v1065 = vadd.f32 0.0, %v1064
        %v1066 = vpop.f32.mrb[0].mxu0
        %v1067 = vpop.f32.mrb[0].mxu0
        %v1068 = vadd.f32 0.0, %v1067
        %v1069 = vpop.f32.mrb[0].mxu0
        %1070 = vmatprep.mubr.bf16.mxu0 0
        %1071 = vmatmul.mubr.bf16.gmra.mrb[0].mxu0 %v964
        %v1072 = vpop.f32.mrb[0].mxu0
        %v1073 = vadd.f32 0.0, %v1072
        %v1074 = vpop.f32.mrb[0].mxu0
        %v1075 = vpop.f32.mrb[0].mxu0
        %v1076 = vadd.f32 0.0, %v1075
        %v1077 = vpop.f32.mrb[0].mxu0
        %1078 = vmatprep.mubr.bf16.mxu0 0
        %1079 = vmatmul.mubr.bf16.gmra.mrb[0].mxu0 %v967
        %v1080 = vpop.f32.mrb[0].mxu0
        %v1081 = vadd.f32 0.0, %v1080
        %v1082 = vpop.f32.mrb[0].mxu0
        %v1083 = vpop.f32.mrb[0].mxu0
        %v1084 = vadd.f32 0.0, %v1083
        %v1085 = vpop.f32.mrb[0].mxu0
        %1086 = vmatprep.mubr.bf16.mxu0 0
        %1087 = vmatmul.mubr.bf16.gmra.mrb[0].mxu0 %v970
        %v1088 = vpop.f32.mrb[0].mxu0
        %v1089 = vadd.f32 0.0, %v1088
        %v1090 = vpop.f32.mrb[0].mxu0
        %v1091 = vpop.f32.mrb[0].mxu0
        %v1092 = vadd.f32 0.0, %v1091
        %v1093 = vpop.f32.mrb[0].mxu0
        %1094 = vmatprep.mubr.bf16.mxu0 0
        %1095 = vmatmul.mubr.bf16.gmra.mrb[0].mxu0 %v973
        %v1096 = vpop.f32.mrb[0].mxu0
        %v1097 = vadd.f32 0.0, %v1096
        %v1098 = vpop.f32.mrb[0].mxu0
        %v1099 = vpop.f32.mrb[0].mxu0
        %v1100 = vadd.f32 0.0, %v1099
        %v1101 = vpop.f32.mrb[0].mxu0
        %1102 = vmatprep.mubr.bf16.mxu0 0
        %1103 = vmatmul.mubr.bf16.gmra.mrb[0].mxu0 %v976
        %v1104 = vpop.f32.mrb[0].mxu0
        %v1105 = vadd.f32 0.0, %v1104
        %v1106 = vpop.f32.mrb[0].mxu0
        %v1107 = vpop.f32.mrb[0].mxu0
        %v1108 = vadd.f32 0.0, %v1107
        %v1109 = vpop.f32.mrb[0].mxu0
        %1110 = vmatprep.mubr.bf16.mxu0 0
        %1111 = vmatmul.mubr.bf16.gmra.mrb[0].mxu0 %v979
        %v1112 = vpop.f32.mrb[0].mxu0
        %v1113 = vadd.f32 0.0, %v1112
        %v1114 = vpop.f32.mrb[0].mxu0
        %v1115 = vpop.f32.mrb[0].mxu0
        %v1116 = vadd.f32 0.0, %v1115
        %v1117 = vpop.f32.mrb[0].mxu0
        %1118 = vmatprep.mubr.bf16.mxu0 0
        %1119 = vmatmul.mubr.bf16.gmra.mrb[0].mxu0 %v982
        %v1120 = vpop.f32.mrb[0].mxu0
        %v1121 = vadd.f32 0.0, %v1120
        %v1122 = vpop.f32.mrb[0].mxu0
        %v1123 = vpop.f32.mrb[0].mxu0
        %v1124 = vadd.f32 0.0, %v1123
        %v1125 = vpop.f32.mrb[0].mxu0
        %1126 = vmatprep.mubr.bf16.mxu0 0
        %1127 = vmatmul.mubr.bf16.gmra.mrb[0].mxu0 %v985
        %v1128 = vpop.f32.mrb[0].mxu0
        %v1129 = vadd.f32 0.0, %v1128
        %v1130 = vpop.f32.mrb[0].mxu0
        %v1131 = vpop.f32.mrb[0].mxu0
        %v1132 = vadd.f32 0.0, %v1131
        %v1133 = vpop.f32.mrb[0].mxu0
        %1134 = vdwg.mxu0
        %v1135 = vadd.f32 %v873, %v1025
        %v1136 = vadd.f32 %v874, %v1028
        %v1137 = vadd.f32 %v875, %v1033
        %v1138 = vadd.f32 %v876, %v1036
        %v1139 = vadd.f32 %v877, %v1041
        %v1140 = vadd.f32 %v878, %v1044
        %v1141 = vadd.f32 %v879, %v1049
        %v1142 = vadd.f32 %v880, %v1052
        %v1143 = vadd.f32 %v881, %v1057
        %v1144 = vadd.f32 %v882, %v1060
        %v1145 = vadd.f32 %v883, %v1065
        %v1146 = vadd.f32 %v884, %v1068
        %v1147 = vadd.f32 %v885, %v1073
        %v1148 = vadd.f32 %v886, %v1076
        %v1149 = vadd.f32 %v887, %v1081
        %v1150 = vadd.f32 %v888, %v1084
        %v1151 = vadd.f32 %v889, %v1089
        %v1152 = vadd.f32 %v890, %v1092
        %v1153 = vadd.f32 %v891, %v1097
        %v1154 = vadd.f32 %v892, %v1100
        %v1155 = vadd.f32 %v893, %v1105
        %v1156 = vadd.f32 %v894, %v1108
        %v1157 = vadd.f32 %v895, %v1113
        %v1158 = vadd.f32 %v896, %v1116
        %v1159 = vadd.f32 %v897, %v1121
        %v1160 = vadd.f32 %v898, %v1124
        %v1161 = vadd.f32 %v899, %v1129
        %v1162 = vadd.f32 %v900, %v1132
        %v1163 = vld [vmem:[%s168 + $0x11] sm:$0xff]
        %v1164 = vld [vmem:[%s168 + $0x19] sm:$0xff]
        %v1165 = vld [vmem:[%s168 + $0x21] sm:$0xff]
        %v1166 = vld [vmem:[%s168 + $0x29] sm:$0xff]
        %v1167 = vld [vmem:[%s168 + $0x31] sm:$0xff]
        %v1168 = vld [vmem:[%s168 + $0x39] sm:$0xff]
        %v1169 = vld [vmem:[%s168 + $0x41] sm:$0xff]
        %v1170 = vld [vmem:[%s168 + $0x49] sm:$0xff]
        %v1171 = vld [vmem:[%s168 + $0x51] sm:$0xff]
        %v1172 = vld [vmem:[%s168 + $0x59] sm:$0xff]
        %v1173 = vld [vmem:[%s168 + $0x61] sm:$0xff]
        %v1174 = vld [vmem:[%s168 + $0x69] sm:$0xff]
        %v1175 = vld [vmem:[%s168 + $0x71] sm:$0xff]
        %v1176 = vld [vmem:[%s168 + $0x79] sm:$0xff]
        %v1177 = vld [vmem:[%s168 + $0x81] sm:$0xff]
        %v1178 = vld [vmem:[%s168 + $0x89] sm:$0xff]
        %v1179 = vld [vmem:[%s168 + $0x91] sm:$0xff]
        %v1180 = vld [vmem:[%s168 + $0x99] sm:$0xff]
        %v1181 = vld [vmem:[%s168 + $0xa1] sm:$0xff]
        %v1182 = vld [vmem:[%s168 + $0xa9] sm:$0xff]
        %v1183 = vld [vmem:[%s168 + $0xb1] sm:$0xff]
        %v1184 = vld [vmem:[%s168 + $0xb9] sm:$0xff]
        %v1185 = vld [vmem:[%s168 + $0xc1] sm:$0xff]
        %v1186 = vld [vmem:[%s168 + $0xc9] sm:$0xff]
        %v1187 = vld [vmem:[%s168 + $0xd1] sm:$0xff]
        %v1188 = vld [vmem:[%s168 + $0xd9] sm:$0xff]
        %v1189 = vld [vmem:[%s168 + $0xe1] sm:$0xff]
        %v1190 = vld [vmem:[%s168 + $0xe9] sm:$0xff]
        %v1191 = vpack.c.bf16 %v1164, %v1163
        %v1192 = vpack.c.bf16 %v1166, %v1165
        %v1193 = vpack.c.bf16 %v1168, %v1167
        %v1194 = vpack.c.bf16 %v1170, %v1169
        %v1195 = vpack.c.bf16 %v1172, %v1171
        %v1196 = vpack.c.bf16 %v1174, %v1173
        %v1197 = vpack.c.bf16 %v1176, %v1175
        %v1198 = vpack.c.bf16 %v1178, %v1177
        %v1199 = vpack.c.bf16 %v1180, %v1179
        %v1200 = vpack.c.bf16 %v1182, %v1181
        %v1201 = vpack.c.bf16 %v1184, %v1183
        %v1202 = vpack.c.bf16 %v1186, %v1185
        %v1203 = vpack.c.bf16 %v1188, %v1187
        %v1204 = vpack.c.bf16 %v1190, %v1189
        %s1205 = scalar_lea.vmem %s1, 8
        %v1206 = vld [vmem:[%s1205] sm:$0x3]
        %v1208 = vsel %vm257, %v1191, 0
        %v1211 = vsel %vm257, %v1192, 0
        %v1214 = vsel %vm257, %v1193, 0
        %v1217 = vsel %vm257, %v1194, 0
        %v1220 = vsel %vm257, %v1195, 0
        %v1223 = vsel %vm257, %v1196, 0
        %v1226 = vsel %vm257, %v1197, 0
        %v1229 = vsel %vm257, %v1198, 0
        %v1232 = vsel %vm257, %v1199, 0
        %v1235 = vsel %vm257, %v1200, 0
        %v1238 = vsel %vm257, %v1201, 0
        %v1241 = vsel %vm257, %v1202, 0
        %v1244 = vsel %vm257, %v1203, 0
        %v1247 = vsel %vm257, %v1204, 0
        %v1250 = vsel %vm300, %v1206, 0
        %1252 = vmatprep.subr.bf16.mxu0 0
        %1253 = vmatpush1.bf16.msra.mxu0 %v1250
        %1254 = vmatprep.subr.bf16.mxu0 0
        %1255 = vmatpush1.bf16.msra.mxu0 0
        %1256 = vmatprep.subr.bf16.mxu0 0
        %1257 = vmatpush1.bf16.msra.mxu0 0
        %1258 = vmatprep.subr.bf16.mxu0 0
        %1259 = vmatpush1.bf16.msra.mxu0 0
        %1260 = vmatprep.subr.bf16.mxu0 0
        %1261 = vmatpush1.bf16.msra.mxu0 0
        %1262 = vmatprep.subr.bf16.mxu0 0
        %1263 = vmatpush1.bf16.msra.mxu0 0
        %1264 = vmatprep.subr.bf16.mxu0 0
        %1265 = vmatpush1.bf16.msra.mxu0 0
        %1266 = vmatprep.subr.bf16.mxu0 0
        %1267 = vmatpush1.bf16.msra.mxu0 0
        %1268 = vmatprep.subr.bf16.mxu0 0
        %1269 = vmatpush1.bf16.msra.mxu0 0
        %1270 = vmatprep.subr.bf16.mxu0 0
        %1271 = vmatpush1.bf16.msra.mxu0 0
        %1272 = vmatprep.subr.bf16.mxu0 0
        %1273 = vmatpush1.bf16.msra.mxu0 0
        %1274 = vmatprep.subr.bf16.mxu0 0
        %1275 = vmatpush1.bf16.msra.mxu0 0
        %1276 = vmatprep.subr.bf16.mxu0 0
        %1277 = vmatpush1.bf16.msra.mxu0 0
        %1278 = vmatprep.subr.bf16.mxu0 0
        %1279 = vmatpush1.bf16.msra.mxu0 0
        %1280 = vmatprep.subr.bf16.mxu0 0
        %1281 = vmatpush1.bf16.msra.mxu0 0
        %1282 = vmatprep.subr.bf16.mxu0 0
        %1283 = vmatpush1.bf16.msra.mxu0 0
        %1284 = vmatprep.mubr.bf16.mxu0 0
        %1285 = vmatmul.mubr.bf16.gmra.mrb[0].mxu0 %v1208
        %v1286 = vpop.f32.mrb[0].mxu0
        %v1287 = vadd.f32 0.0, %v1286
        %v1288 = vpop.f32.mrb[0].mxu0
        %v1289 = vpop.f32.mrb[0].mxu0
        %v1290 = vadd.f32 0.0, %v1289
        %v1291 = vpop.f32.mrb[0].mxu0
        %1292 = vmatprep.mubr.bf16.mxu0 0
        %1293 = vmatmul.mubr.bf16.gmra.mrb[0].mxu0 %v1211
        %v1294 = vpop.f32.mrb[0].mxu0
        %v1295 = vadd.f32 0.0, %v1294
        %v1296 = vpop.f32.mrb[0].mxu0
        %v1297 = vpop.f32.mrb[0].mxu0
        %v1298 = vadd.f32 0.0, %v1297
        %v1299 = vpop.f32.mrb[0].mxu0
        %1300 = vmatprep.mubr.bf16.mxu0 0
        %1301 = vmatmul.mubr.bf16.gmra.mrb[0].mxu0 %v1214
        %v1302 = vpop.f32.mrb[0].mxu0
        %v1303 = vadd.f32 0.0, %v1302
        %v1304 = vpop.f32.mrb[0].mxu0
        %v1305 = vpop.f32.mrb[0].mxu0
        %v1306 = vadd.f32 0.0, %v1305
        %v1307 = vpop.f32.mrb[0].mxu0
        %1308 = vmatprep.mubr.bf16.mxu0 0
        %1309 = vmatmul.mubr.bf16.gmra.mrb[0].mxu0 %v1217
        %v1310 = vpop.f32.mrb[0].mxu0
        %v1311 = vadd.f32 0.0, %v1310
        %v1312 = vpop.f32.mrb[0].mxu0
        %v1313 = vpop.f32.mrb[0].mxu0
        %v1314 = vadd.f32 0.0, %v1313
        %v1315 = vpop.f32.mrb[0].mxu0
        %1316 = vmatprep.mubr.bf16.mxu0 0
        %1317 = vmatmul.mubr.bf16.gmra.mrb[0].mxu0 %v1220
        %v1318 = vpop.f32.mrb[0].mxu0
        %v1319 = vadd.f32 0.0, %v1318
        %v1320 = vpop.f32.mrb[0].mxu0
        %v1321 = vpop.f32.mrb[0].mxu0
        %v1322 = vadd.f32 0.0, %v1321
        %v1323 = vpop.f32.mrb[0].mxu0
        %1324 = vmatprep.mubr.bf16.mxu0 0
        %1325 = vmatmul.mubr.bf16.gmra.mrb[0].mxu0 %v1223
        %v1326 = vpop.f32.mrb[0].mxu0
        %v1327 = vadd.f32 0.0, %v1326
        %v1328 = vpop.f32.mrb[0].mxu0
        %v1329 = vpop.f32.mrb[0].mxu0
        %v1330 = vadd.f32 0.0, %v1329
        %v1331 = vpop.f32.mrb[0].mxu0
        %1332 = vmatprep.mubr.bf16.mxu0 0
        %1333 = vmatmul.mubr.bf16.gmra.mrb[0].mxu0 %v1226
        %v1334 = vpop.f32.mrb[0].mxu0
        %v1335 = vadd.f32 0.0, %v1334
        %v1336 = vpop.f32.mrb[0].mxu0
        %v1337 = vpop.f32.mrb[0].mxu0
        %v1338 = vadd.f32 0.0, %v1337
        %v1339 = vpop.f32.mrb[0].mxu0
        %1340 = vmatprep.mubr.bf16.mxu0 0
        %1341 = vmatmul.mubr.bf16.gmra.mrb[0].mxu0 %v1229
        %v1342 = vpop.f32.mrb[0].mxu0
        %v1343 = vadd.f32 0.0, %v1342
        %v1344 = vpop.f32.mrb[0].mxu0
        %v1345 = vpop.f32.mrb[0].mxu0
        %v1346 = vadd.f32 0.0, %v1345
        %v1347 = vpop.f32.mrb[0].mxu0
        %1348 = vmatprep.mubr.bf16.mxu0 0
        %1349 = vmatmul.mubr.bf16.gmra.mrb[0].mxu0 %v1232
        %v1350 = vpop.f32.mrb[0].mxu0
        %v1351 = vadd.f32 0.0, %v1350
        %v1352 = vpop.f32.mrb[0].mxu0
        %v1353 = vpop.f32.mrb[0].mxu0
        %v1354 = vadd.f32 0.0, %v1353
        %v1355 = vpop.f32.mrb[0].mxu0
        %1356 = vmatprep.mubr.bf16.mxu0 0
        %1357 = vmatmul.mubr.bf16.gmra.mrb[0].mxu0 %v1235
        %v1358 = vpop.f32.mrb[0].mxu0
        %v1359 = vadd.f32 0.0, %v1358
        %v1360 = vpop.f32.mrb[0].mxu0
        %v1361 = vpop.f32.mrb[0].mxu0
        %v1362 = vadd.f32 0.0, %v1361
        %v1363 = vpop.f32.mrb[0].mxu0
        %1364 = vmatprep.mubr.bf16.mxu0 0
        %1365 = vmatmul.mubr.bf16.gmra.mrb[0].mxu0 %v1238
        %v1366 = vpop.f32.mrb[0].mxu0
        %v1367 = vadd.f32 0.0, %v1366
        %v1368 = vpop.f32.mrb[0].mxu0
        %v1369 = vpop.f32.mrb[0].mxu0
        %v1370 = vadd.f32 0.0, %v1369
        %v1371 = vpop.f32.mrb[0].mxu0
        %1372 = vmatprep.mubr.bf16.mxu0 0
        %1373 = vmatmul.mubr.bf16.gmra.mrb[0].mxu0 %v1241
        %v1374 = vpop.f32.mrb[0].mxu0
        %v1375 = vadd.f32 0.0, %v1374
        %v1376 = vpop.f32.mrb[0].mxu0
        %v1377 = vpop.f32.mrb[0].mxu0
        %v1378 = vadd.f32 0.0, %v1377
        %v1379 = vpop.f32.mrb[0].mxu0
        %1380 = vmatprep.mubr.bf16.mxu0 0
        %1381 = vmatmul.mubr.bf16.gmra.mrb[0].mxu0 %v1244
        %v1382 = vpop.f32.mrb[0].mxu0
        %v1383 = vadd.f32 0.0, %v1382
        %v1384 = vpop.f32.mrb[0].mxu0
        %v1385 = vpop.f32.mrb[0].mxu0
        %v1386 = vadd.f32 0.0, %v1385
        %v1387 = vpop.f32.mrb[0].mxu0
        %1388 = vmatprep.mubr.bf16.mxu0 0
        %1389 = vmatmul.mubr.bf16.gmra.mrb[0].mxu0 %v1247
        %v1390 = vpop.f32.mrb[0].mxu0
        %v1391 = vadd.f32 0.0, %v1390
        %v1392 = vpop.f32.mrb[0].mxu0
        %v1393 = vpop.f32.mrb[0].mxu0
        %v1394 = vadd.f32 0.0, %v1393
        %v1395 = vpop.f32.mrb[0].mxu0
        %1396 = vdwg.mxu0
        %v1397 = vadd.f32 %v1135, %v1287
        %v1398 = vadd.f32 %v1136, %v1290
        %v1399 = vadd.f32 %v1137, %v1295
        %v1400 = vadd.f32 %v1138, %v1298
        %v1401 = vadd.f32 %v1139, %v1303
        %v1402 = vadd.f32 %v1140, %v1306
        %v1403 = vadd.f32 %v1141, %v1311
        %v1404 = vadd.f32 %v1142, %v1314
        %v1405 = vadd.f32 %v1143, %v1319
        %v1406 = vadd.f32 %v1144, %v1322
        %v1407 = vadd.f32 %v1145, %v1327
        %v1408 = vadd.f32 %v1146, %v1330
        %v1409 = vadd.f32 %v1147, %v1335
        %v1410 = vadd.f32 %v1148, %v1338
        %v1411 = vadd.f32 %v1149, %v1343
        %v1412 = vadd.f32 %v1150, %v1346
        %v1413 = vadd.f32 %v1151, %v1351
        %v1414 = vadd.f32 %v1152, %v1354
        %v1415 = vadd.f32 %v1153, %v1359
        %v1416 = vadd.f32 %v1154, %v1362
        %v1417 = vadd.f32 %v1155, %v1367
        %v1418 = vadd.f32 %v1156, %v1370
        %v1419 = vadd.f32 %v1157, %v1375
        %v1420 = vadd.f32 %v1158, %v1378
        %v1421 = vadd.f32 %v1159, %v1383
        %v1422 = vadd.f32 %v1160, %v1386
        %v1423 = vadd.f32 %v1161, %v1391
        %v1424 = vadd.f32 %v1162, %v1394
        %v1425 = vld [vmem:[%s168 + $0x12] sm:$0xff]
        %v1426 = vld [vmem:[%s168 + $0x1a] sm:$0xff]
        %v1427 = vld [vmem:[%s168 + $0x22] sm:$0xff]
        %v1428 = vld [vmem:[%s168 + $0x2a] sm:$0xff]
        %v1429 = vld [vmem:[%s168 + $0x32] sm:$0xff]
        %v1430 = vld [vmem:[%s168 + $0x3a] sm:$0xff]
        %v1431 = vld [vmem:[%s168 + $0x42] sm:$0xff]
        %v1432 = vld [vmem:[%s168 + $0x4a] sm:$0xff]
        %v1433 = vld [vmem:[%s168 + $0x52] sm:$0xff]
        %v1434 = vld [vmem:[%s168 + $0x5a] sm:$0xff]
        %v1435 = vld [vmem:[%s168 + $0x62] sm:$0xff]
        %v1436 = vld [vmem:[%s168 + $0x6a] sm:$0xff]
        %v1437 = vld [vmem:[%s168 + $0x72] sm:$0xff]
        %v1438 = vld [vmem:[%s168 + $0x7a] sm:$0xff]
        %v1439 = vld [vmem:[%s168 + $0x82] sm:$0xff]
        %v1440 = vld [vmem:[%s168 + $0x8a] sm:$0xff]
        %v1441 = vld [vmem:[%s168 + $0x92] sm:$0xff]
        %v1442 = vld [vmem:[%s168 + $0x9a] sm:$0xff]
        %v1443 = vld [vmem:[%s168 + $0xa2] sm:$0xff]
        %v1444 = vld [vmem:[%s168 + $0xaa] sm:$0xff]
        %v1445 = vld [vmem:[%s168 + $0xb2] sm:$0xff]
        %v1446 = vld [vmem:[%s168 + $0xba] sm:$0xff]
        %v1447 = vld [vmem:[%s168 + $0xc2] sm:$0xff]
        %v1448 = vld [vmem:[%s168 + $0xca] sm:$0xff]
        %v1449 = vld [vmem:[%s168 + $0xd2] sm:$0xff]
        %v1450 = vld [vmem:[%s168 + $0xda] sm:$0xff]
        %v1451 = vld [vmem:[%s168 + $0xe2] sm:$0xff]
        %v1452 = vld [vmem:[%s168 + $0xea] sm:$0xff]
        %v1453 = vpack.c.bf16 %v1426, %v1425
        %v1454 = vpack.c.bf16 %v1428, %v1427
        %v1455 = vpack.c.bf16 %v1430, %v1429
        %v1456 = vpack.c.bf16 %v1432, %v1431
        %v1457 = vpack.c.bf16 %v1434, %v1433
        %v1458 = vpack.c.bf16 %v1436, %v1435
        %v1459 = vpack.c.bf16 %v1438, %v1437
        %v1460 = vpack.c.bf16 %v1440, %v1439
        %v1461 = vpack.c.bf16 %v1442, %v1441
        %v1462 = vpack.c.bf16 %v1444, %v1443
        %v1463 = vpack.c.bf16 %v1446, %v1445
        %v1464 = vpack.c.bf16 %v1448, %v1447
        %v1465 = vpack.c.bf16 %v1450, %v1449
        %v1466 = vpack.c.bf16 %v1452, %v1451
        %s1467 = scalar_lea.vmem %s1, 10
        %v1468 = vld [vmem:[%s1467] sm:$0x3]
        %v1470 = vsel %vm257, %v1453, 0
        %v1473 = vsel %vm257, %v1454, 0
        %v1476 = vsel %vm257, %v1455, 0
        %v1479 = vsel %vm257, %v1456, 0
        %v1482 = vsel %vm257, %v1457, 0
        %v1485 = vsel %vm257, %v1458, 0
        %v1488 = vsel %vm257, %v1459, 0
        %v1491 = vsel %vm257, %v1460, 0
        %v1494 = vsel %vm257, %v1461, 0
        %v1497 = vsel %vm257, %v1462, 0
        %v1500 = vsel %vm257, %v1463, 0
        %v1503 = vsel %vm257, %v1464, 0
        %v1506 = vsel %vm257, %v1465, 0
        %v1509 = vsel %vm257, %v1466, 0
        %v1512 = vsel %vm300, %v1468, 0
        %1514 = vmatprep.subr.bf16.mxu0 0
        %1515 = vmatpush1.bf16.msra.mxu0 %v1512
        %1516 = vmatprep.subr.bf16.mxu0 0
        %1517 = vmatpush1.bf16.msra.mxu0 0
        %1518 = vmatprep.subr.bf16.mxu0 0
        %1519 = vmatpush1.bf16.msra.mxu0 0
        %1520 = vmatprep.subr.bf16.mxu0 0
        %1521 = vmatpush1.bf16.msra.mxu0 0
        %1522 = vmatprep.subr.bf16.mxu0 0
        %1523 = vmatpush1.bf16.msra.mxu0 0
        %1524 = vmatprep.subr.bf16.mxu0 0
        %1525 = vmatpush1.bf16.msra.mxu0 0
        %1526 = vmatprep.subr.bf16.mxu0 0
        %1527 = vmatpush1.bf16.msra.mxu0 0
        %1528 = vmatprep.subr.bf16.mxu0 0
        %1529 = vmatpush1.bf16.msra.mxu0 0
        %1530 = vmatprep.subr.bf16.mxu0 0
        %1531 = vmatpush1.bf16.msra.mxu0 0
        %1532 = vmatprep.subr.bf16.mxu0 0
        %1533 = vmatpush1.bf16.msra.mxu0 0
        %1534 = vmatprep.subr.bf16.mxu0 0
        %1535 = vmatpush1.bf16.msra.mxu0 0
        %1536 = vmatprep.subr.bf16.mxu0 0
        %1537 = vmatpush1.bf16.msra.mxu0 0
        %1538 = vmatprep.subr.bf16.mxu0 0
        %1539 = vmatpush1.bf16.msra.mxu0 0
        %1540 = vmatprep.subr.bf16.mxu0 0
        %1541 = vmatpush1.bf16.msra.mxu0 0
        %1542 = vmatprep.subr.bf16.mxu0 0
        %1543 = vmatpush1.bf16.msra.mxu0 0
        %1544 = vmatprep.subr.bf16.mxu0 0
        %1545 = vmatpush1.bf16.msra.mxu0 0
        %1546 = vmatprep.mubr.bf16.mxu0 0
        %1547 = vmatmul.mubr.bf16.gmra.mrb[0].mxu0 %v1470
        %v1548 = vpop.f32.mrb[0].mxu0
        %v1549 = vadd.f32 0.0, %v1548
        %v1550 = vpop.f32.mrb[0].mxu0
        %v1551 = vpop.f32.mrb[0].mxu0
        %v1552 = vadd.f32 0.0, %v1551
        %v1553 = vpop.f32.mrb[0].mxu0
        %1554 = vmatprep.mubr.bf16.mxu0 0
        %1555 = vmatmul.mubr.bf16.gmra.mrb[0].mxu0 %v1473
        %v1556 = vpop.f32.mrb[0].mxu0
        %v1557 = vadd.f32 0.0, %v1556
        %v1558 = vpop.f32.mrb[0].mxu0
        %v1559 = vpop.f32.mrb[0].mxu0
        %v1560 = vadd.f32 0.0, %v1559
        %v1561 = vpop.f32.mrb[0].mxu0
        %1562 = vmatprep.mubr.bf16.mxu0 0
        %1563 = vmatmul.mubr.bf16.gmra.mrb[0].mxu0 %v1476
        %v1564 = vpop.f32.mrb[0].mxu0
        %v1565 = vadd.f32 0.0, %v1564
        %v1566 = vpop.f32.mrb[0].mxu0
        %v1567 = vpop.f32.mrb[0].mxu0
        %v1568 = vadd.f32 0.0, %v1567
        %v1569 = vpop.f32.mrb[0].mxu0
        %1570 = vmatprep.mubr.bf16.mxu0 0
        %1571 = vmatmul.mubr.bf16.gmra.mrb[0].mxu0 %v1479
        %v1572 = vpop.f32.mrb[0].mxu0
        %v1573 = vadd.f32 0.0, %v1572
        %v1574 = vpop.f32.mrb[0].mxu0
        %v1575 = vpop.f32.mrb[0].mxu0
        %v1576 = vadd.f32 0.0, %v1575
        %v1577 = vpop.f32.mrb[0].mxu0
        %1578 = vmatprep.mubr.bf16.mxu0 0
        %1579 = vmatmul.mubr.bf16.gmra.mrb[0].mxu0 %v1482
        %v1580 = vpop.f32.mrb[0].mxu0
        %v1581 = vadd.f32 0.0, %v1580
        %v1582 = vpop.f32.mrb[0].mxu0
        %v1583 = vpop.f32.mrb[0].mxu0
        %v1584 = vadd.f32 0.0, %v1583
        %v1585 = vpop.f32.mrb[0].mxu0
        %1586 = vmatprep.mubr.bf16.mxu0 0
        %1587 = vmatmul.mubr.bf16.gmra.mrb[0].mxu0 %v1485
        %v1588 = vpop.f32.mrb[0].mxu0
        %v1589 = vadd.f32 0.0, %v1588
        %v1590 = vpop.f32.mrb[0].mxu0
        %v1591 = vpop.f32.mrb[0].mxu0
        %v1592 = vadd.f32 0.0, %v1591
        %v1593 = vpop.f32.mrb[0].mxu0
        %1594 = vmatprep.mubr.bf16.mxu0 0
        %1595 = vmatmul.mubr.bf16.gmra.mrb[0].mxu0 %v1488
        %v1596 = vpop.f32.mrb[0].mxu0
        %v1597 = vadd.f32 0.0, %v1596
        %v1598 = vpop.f32.mrb[0].mxu0
        %v1599 = vpop.f32.mrb[0].mxu0
        %v1600 = vadd.f32 0.0, %v1599
        %v1601 = vpop.f32.mrb[0].mxu0
        %1602 = vmatprep.mubr.bf16.mxu0 0
        %1603 = vmatmul.mubr.bf16.gmra.mrb[0].mxu0 %v1491
        %v1604 = vpop.f32.mrb[0].mxu0
        %v1605 = vadd.f32 0.0, %v1604
        %v1606 = vpop.f32.mrb[0].mxu0
        %v1607 = vpop.f32.mrb[0].mxu0
        %v1608 = vadd.f32 0.0, %v1607
        %v1609 = vpop.f32.mrb[0].mxu0
        %1610 = vmatprep.mubr.bf16.mxu0 0
        %1611 = vmatmul.mubr.bf16.gmra.mrb[0].mxu0 %v1494
        %v1612 = vpop.f32.mrb[0].mxu0
        %v1613 = vadd.f32 0.0, %v1612
        %v1614 = vpop.f32.mrb[0].mxu0
        %v1615 = vpop.f32.mrb[0].mxu0
        %v1616 = vadd.f32 0.0, %v1615
        %v1617 = vpop.f32.mrb[0].mxu0
        %1618 = vmatprep.mubr.bf16.mxu0 0
        %1619 = vmatmul.mubr.bf16.gmra.mrb[0].mxu0 %v1497
        %v1620 = vpop.f32.mrb[0].mxu0
        %v1621 = vadd.f32 0.0, %v1620
        %v1622 = vpop.f32.mrb[0].mxu0
        %v1623 = vpop.f32.mrb[0].mxu0
        %v1624 = vadd.f32 0.0, %v1623
        %v1625 = vpop.f32.mrb[0].mxu0
        %1626 = vmatprep.mubr.bf16.mxu0 0
        %1627 = vmatmul.mubr.bf16.gmra.mrb[0].mxu0 %v1500
        %v1628 = vpop.f32.mrb[0].mxu0
        %v1629 = vadd.f32 0.0, %v1628
        %v1630 = vpop.f32.mrb[0].mxu0
        %v1631 = vpop.f32.mrb[0].mxu0
        %v1632 = vadd.f32 0.0, %v1631
        %v1633 = vpop.f32.mrb[0].mxu0
        %1634 = vmatprep.mubr.bf16.mxu0 0
        %1635 = vmatmul.mubr.bf16.gmra.mrb[0].mxu0 %v1503
        %v1636 = vpop.f32.mrb[0].mxu0
        %v1637 = vadd.f32 0.0, %v1636
        %v1638 = vpop.f32.mrb[0].mxu0
        %v1639 = vpop.f32.mrb[0].mxu0
        %v1640 = vadd.f32 0.0, %v1639
        %v1641 = vpop.f32.mrb[0].mxu0
        %1642 = vmatprep.mubr.bf16.mxu0 0
        %1643 = vmatmul.mubr.bf16.gmra.mrb[0].mxu0 %v1506
        %v1644 = vpop.f32.mrb[0].mxu0
        %v1645 = vadd.f32 0.0, %v1644
        %v1646 = vpop.f32.mrb[0].mxu0
        %v1647 = vpop.f32.mrb[0].mxu0
        %v1648 = vadd.f32 0.0, %v1647
        %v1649 = vpop.f32.mrb[0].mxu0
        %1650 = vmatprep.mubr.bf16.mxu0 0
        %1651 = vmatmul.mubr.bf16.gmra.mrb[0].mxu0 %v1509
        %v1652 = vpop.f32.mrb[0].mxu0
        %v1653 = vadd.f32 0.0, %v1652
        %v1654 = vpop.f32.mrb[0].mxu0
        %v1655 = vpop.f32.mrb[0].mxu0
        %v1656 = vadd.f32 0.0, %v1655
        %v1657 = vpop.f32.mrb[0].mxu0
        %1658 = vdwg.mxu0
        %v1659 = vadd.f32 %v1397, %v1549
        %v1660 = vadd.f32 %v1398, %v1552
        %v1661 = vadd.f32 %v1399, %v1557
        %v1662 = vadd.f32 %v1400, %v1560
        %v1663 = vadd.f32 %v1401, %v1565
        %v1664 = vadd.f32 %v1402, %v1568
        %v1665 = vadd.f32 %v1403, %v1573
        %v1666 = vadd.f32 %v1404, %v1576
        %v1667 = vadd.f32 %v1405, %v1581
        %v1668 = vadd.f32 %v1406, %v1584
        %v1669 = vadd.f32 %v1407, %v1589
        %v1670 = vadd.f32 %v1408, %v1592
        %v1671 = vadd.f32 %v1409, %v1597
        %v1672 = vadd.f32 %v1410, %v1600
        %v1673 = vadd.f32 %v1411, %v1605
        %v1674 = vadd.f32 %v1412, %v1608
        %v1675 = vadd.f32 %v1413, %v1613
        %v1676 = vadd.f32 %v1414, %v1616
        %v1677 = vadd.f32 %v1415, %v1621
        %v1678 = vadd.f32 %v1416, %v1624
        %v1679 = vadd.f32 %v1417, %v1629
        %v1680 = vadd.f32 %v1418, %v1632
        %v1681 = vadd.f32 %v1419, %v1637
        %v1682 = vadd.f32 %v1420, %v1640
        %v1683 = vadd.f32 %v1421, %v1645
        %v1684 = vadd.f32 %v1422, %v1648
        %v1685 = vadd.f32 %v1423, %v1653
        %v1686 = vadd.f32 %v1424, %v1656
        %v1687 = vld [vmem:[%s168 + $0x20] sm:$0xff]
        %v1688 = vld [vmem:[%s168 + $0x28] sm:$0xff]
        %v1689 = vld [vmem:[%s168 + $0x30] sm:$0xff]
        %v1690 = vld [vmem:[%s168 + $0x38] sm:$0xff]
        %v1691 = vld [vmem:[%s168 + $0x40] sm:$0xff]
        %v1692 = vld [vmem:[%s168 + $0x48] sm:$0xff]
        %v1693 = vld [vmem:[%s168 + $0x50] sm:$0xff]
        %v1694 = vld [vmem:[%s168 + $0x58] sm:$0xff]
        %v1695 = vld [vmem:[%s168 + $0x60] sm:$0xff]
        %v1696 = vld [vmem:[%s168 + $0x68] sm:$0xff]
        %v1697 = vld [vmem:[%s168 + $0x70] sm:$0xff]
        %v1698 = vld [vmem:[%s168 + $0x78] sm:$0xff]
        %v1699 = vld [vmem:[%s168 + $0x80] sm:$0xff]
        %v1700 = vld [vmem:[%s168 + $0x88] sm:$0xff]
        %v1701 = vld [vmem:[%s168 + $0x90] sm:$0xff]
        %v1702 = vld [vmem:[%s168 + $0x98] sm:$0xff]
        %v1703 = vld [vmem:[%s168 + $0xa0] sm:$0xff]
        %v1704 = vld [vmem:[%s168 + $0xa8] sm:$0xff]
        %v1705 = vld [vmem:[%s168 + $0xb0] sm:$0xff]
        %v1706 = vld [vmem:[%s168 + $0xb8] sm:$0xff]
        %v1707 = vld [vmem:[%s168 + $0xc0] sm:$0xff]
        %v1708 = vld [vmem:[%s168 + $0xc8] sm:$0xff]
        %v1709 = vld [vmem:[%s168 + $0xd0] sm:$0xff]
        %v1710 = vld [vmem:[%s168 + $0xd8] sm:$0xff]
        %v1711 = vld [vmem:[%s168 + $0xe0] sm:$0xff]
        %v1712 = vld [vmem:[%s168 + $0xe8] sm:$0xff]
        %v1713 = vld [vmem:[%s168 + $0xf0] sm:$0xff]
        %v1714 = vld [vmem:[%s168 + $0xf8] sm:$0xff]
        %v1715 = vpack.c.bf16 %v1688, %v1687
        %v1716 = vpack.c.bf16 %v1690, %v1689
        %v1717 = vpack.c.bf16 %v1692, %v1691
        %v1718 = vpack.c.bf16 %v1694, %v1693
        %v1719 = vpack.c.bf16 %v1696, %v1695
        %v1720 = vpack.c.bf16 %v1698, %v1697
        %v1721 = vpack.c.bf16 %v1700, %v1699
        %v1722 = vpack.c.bf16 %v1702, %v1701
        %v1723 = vpack.c.bf16 %v1704, %v1703
        %v1724 = vpack.c.bf16 %v1706, %v1705
        %v1725 = vpack.c.bf16 %v1708, %v1707
        %v1726 = vpack.c.bf16 %v1710, %v1709
        %v1727 = vpack.c.bf16 %v1712, %v1711
        %v1728 = vpack.c.bf16 %v1714, %v1713
        %s1729 = scalar_lea.vmem %s1, 12
        %v1730 = vld [vmem:[%s1729] sm:$0x3]
        %v1732 = vsel %vm257, %v1715, 0
        %v1735 = vsel %vm257, %v1716, 0
        %v1738 = vsel %vm257, %v1717, 0
        %v1741 = vsel %vm257, %v1718, 0
        %v1744 = vsel %vm257, %v1719, 0
        %v1747 = vsel %vm257, %v1720, 0
        %v1750 = vsel %vm257, %v1721, 0
        %v1753 = vsel %vm257, %v1722, 0
        %v1756 = vsel %vm257, %v1723, 0
        %v1759 = vsel %vm257, %v1724, 0
        %v1762 = vsel %vm257, %v1725, 0
        %v1765 = vsel %vm257, %v1726, 0
        %v1768 = vsel %vm257, %v1727, 0
        %v1771 = vsel %vm257, %v1728, 0
        %v1774 = vsel %vm300, %v1730, 0
        %1776 = vmatprep.subr.bf16.mxu0 0
        %1777 = vmatpush1.bf16.msra.mxu0 %v1774
        %1778 = vmatprep.subr.bf16.mxu0 0
        %1779 = vmatpush1.bf16.msra.mxu0 0
        %1780 = vmatprep.subr.bf16.mxu0 0
        %1781 = vmatpush1.bf16.msra.mxu0 0
        %1782 = vmatprep.subr.bf16.mxu0 0
        %1783 = vmatpush1.bf16.msra.mxu0 0
        %1784 = vmatprep.subr.bf16.mxu0 0
        %1785 = vmatpush1.bf16.msra.mxu0 0
        %1786 = vmatprep.subr.bf16.mxu0 0
        %1787 = vmatpush1.bf16.msra.mxu0 0
        %1788 = vmatprep.subr.bf16.mxu0 0
        %1789 = vmatpush1.bf16.msra.mxu0 0
        %1790 = vmatprep.subr.bf16.mxu0 0
        %1791 = vmatpush1.bf16.msra.mxu0 0
        %1792 = vmatprep.subr.bf16.mxu0 0
        %1793 = vmatpush1.bf16.msra.mxu0 0
        %1794 = vmatprep.subr.bf16.mxu0 0
        %1795 = vmatpush1.bf16.msra.mxu0 0
        %1796 = vmatprep.subr.bf16.mxu0 0
        %1797 = vmatpush1.bf16.msra.mxu0 0
        %1798 = vmatprep.subr.bf16.mxu0 0
        %1799 = vmatpush1.bf16.msra.mxu0 0
        %1800 = vmatprep.subr.bf16.mxu0 0
        %1801 = vmatpush1.bf16.msra.mxu0 0
        %1802 = vmatprep.subr.bf16.mxu0 0
        %1803 = vmatpush1.bf16.msra.mxu0 0
        %1804 = vmatprep.subr.bf16.mxu0 0
        %1805 = vmatpush1.bf16.msra.mxu0 0
        %1806 = vmatprep.subr.bf16.mxu0 0
        %1807 = vmatpush1.bf16.msra.mxu0 0
        %1808 = vmatprep.mubr.bf16.mxu0 0
        %1809 = vmatmul.mubr.bf16.gmra.mrb[0].mxu0 %v1732
        %v1810 = vpop.f32.mrb[0].mxu0
        %v1811 = vadd.f32 0.0, %v1810
        %v1812 = vpop.f32.mrb[0].mxu0
        %v1813 = vpop.f32.mrb[0].mxu0
        %v1814 = vadd.f32 0.0, %v1813
        %v1815 = vpop.f32.mrb[0].mxu0
        %1816 = vmatprep.mubr.bf16.mxu0 0
        %1817 = vmatmul.mubr.bf16.gmra.mrb[0].mxu0 %v1735
        %v1818 = vpop.f32.mrb[0].mxu0
        %v1819 = vadd.f32 0.0, %v1818
        %v1820 = vpop.f32.mrb[0].mxu0
        %v1821 = vpop.f32.mrb[0].mxu0
        %v1822 = vadd.f32 0.0, %v1821
        %v1823 = vpop.f32.mrb[0].mxu0
        %1824 = vmatprep.mubr.bf16.mxu0 0
        %1825 = vmatmul.mubr.bf16.gmra.mrb[0].mxu0 %v1738
        %v1826 = vpop.f32.mrb[0].mxu0
        %v1827 = vadd.f32 0.0, %v1826
        %v1828 = vpop.f32.mrb[0].mxu0
        %v1829 = vpop.f32.mrb[0].mxu0
        %v1830 = vadd.f32 0.0, %v1829
        %v1831 = vpop.f32.mrb[0].mxu0
        %1832 = vmatprep.mubr.bf16.mxu0 0
        %1833 = vmatmul.mubr.bf16.gmra.mrb[0].mxu0 %v1741
        %v1834 = vpop.f32.mrb[0].mxu0
        %v1835 = vadd.f32 0.0, %v1834
        %v1836 = vpop.f32.mrb[0].mxu0
        %v1837 = vpop.f32.mrb[0].mxu0
        %v1838 = vadd.f32 0.0, %v1837
        %v1839 = vpop.f32.mrb[0].mxu0
        %1840 = vmatprep.mubr.bf16.mxu0 0
        %1841 = vmatmul.mubr.bf16.gmra.mrb[0].mxu0 %v1744
        %v1842 = vpop.f32.mrb[0].mxu0
        %v1843 = vadd.f32 0.0, %v1842
        %v1844 = vpop.f32.mrb[0].mxu0
        %v1845 = vpop.f32.mrb[0].mxu0
        %v1846 = vadd.f32 0.0, %v1845
        %v1847 = vpop.f32.mrb[0].mxu0
        %1848 = vmatprep.mubr.bf16.mxu0 0
        %1849 = vmatmul.mubr.bf16.gmra.mrb[0].mxu0 %v1747
        %v1850 = vpop.f32.mrb[0].mxu0
        %v1851 = vadd.f32 0.0, %v1850
        %v1852 = vpop.f32.mrb[0].mxu0
        %v1853 = vpop.f32.mrb[0].mxu0
        %v1854 = vadd.f32 0.0, %v1853
        %v1855 = vpop.f32.mrb[0].mxu0
        %1856 = vmatprep.mubr.bf16.mxu0 0
        %1857 = vmatmul.mubr.bf16.gmra.mrb[0].mxu0 %v1750
        %v1858 = vpop.f32.mrb[0].mxu0
        %v1859 = vadd.f32 0.0, %v1858
        %v1860 = vpop.f32.mrb[0].mxu0
        %v1861 = vpop.f32.mrb[0].mxu0
        %v1862 = vadd.f32 0.0, %v1861
        %v1863 = vpop.f32.mrb[0].mxu0
        %1864 = vmatprep.mubr.bf16.mxu0 0
        %1865 = vmatmul.mubr.bf16.gmra.mrb[0].mxu0 %v1753
        %v1866 = vpop.f32.mrb[0].mxu0
        %v1867 = vadd.f32 0.0, %v1866
        %v1868 = vpop.f32.mrb[0].mxu0
        %v1869 = vpop.f32.mrb[0].mxu0
        %v1870 = vadd.f32 0.0, %v1869
        %v1871 = vpop.f32.mrb[0].mxu0
        %1872 = vmatprep.mubr.bf16.mxu0 0
        %1873 = vmatmul.mubr.bf16.gmra.mrb[0].mxu0 %v1756
        %v1874 = vpop.f32.mrb[0].mxu0
        %v1875 = vadd.f32 0.0, %v1874
        %v1876 = vpop.f32.mrb[0].mxu0
        %v1877 = vpop.f32.mrb[0].mxu0
        %v1878 = vadd.f32 0.0, %v1877
        %v1879 = vpop.f32.mrb[0].mxu0
        %1880 = vmatprep.mubr.bf16.mxu0 0
        %1881 = vmatmul.mubr.bf16.gmra.mrb[0].mxu0 %v1759
        %v1882 = vpop.f32.mrb[0].mxu0
        %v1883 = vadd.f32 0.0, %v1882
        %v1884 = vpop.f32.mrb[0].mxu0
        %v1885 = vpop.f32.mrb[0].mxu0
        %v1886 = vadd.f32 0.0, %v1885
        %v1887 = vpop.f32.mrb[0].mxu0
        %1888 = vmatprep.mubr.bf16.mxu0 0
        %1889 = vmatmul.mubr.bf16.gmra.mrb[0].mxu0 %v1762
        %v1890 = vpop.f32.mrb[0].mxu0
        %v1891 = vadd.f32 0.0, %v1890
        %v1892 = vpop.f32.mrb[0].mxu0
        %v1893 = vpop.f32.mrb[0].mxu0
        %v1894 = vadd.f32 0.0, %v1893
        %v1895 = vpop.f32.mrb[0].mxu0
        %1896 = vmatprep.mubr.bf16.mxu0 0
        %1897 = vmatmul.mubr.bf16.gmra.mrb[0].mxu0 %v1765
        %v1898 = vpop.f32.mrb[0].mxu0
        %v1899 = vadd.f32 0.0, %v1898
        %v1900 = vpop.f32.mrb[0].mxu0
        %v1901 = vpop.f32.mrb[0].mxu0
        %v1902 = vadd.f32 0.0, %v1901
        %v1903 = vpop.f32.mrb[0].mxu0
        %1904 = vmatprep.mubr.bf16.mxu0 0
        %1905 = vmatmul.mubr.bf16.gmra.mrb[0].mxu0 %v1768
        %v1906 = vpop.f32.mrb[0].mxu0
        %v1907 = vadd.f32 0.0, %v1906
        %v1908 = vpop.f32.mrb[0].mxu0
        %v1909 = vpop.f32.mrb[0].mxu0
        %v1910 = vadd.f32 0.0, %v1909
        %v1911 = vpop.f32.mrb[0].mxu0
        %1912 = vmatprep.mubr.bf16.mxu0 0
        %1913 = vmatmul.mubr.bf16.gmra.mrb[0].mxu0 %v1771
        %v1914 = vpop.f32.mrb[0].mxu0
        %v1915 = vadd.f32 0.0, %v1914
        %v1916 = vpop.f32.mrb[0].mxu0
        %v1917 = vpop.f32.mrb[0].mxu0
        %v1918 = vadd.f32 0.0, %v1917
        %v1919 = vpop.f32.mrb[0].mxu0
        %1920 = vdwg.mxu0
        %v1921 = vadd.f32 %v1659, %v1811
        %v1922 = vadd.f32 %v1660, %v1814
        %v1923 = vadd.f32 %v1661, %v1819
        %v1924 = vadd.f32 %v1662, %v1822
        %v1925 = vadd.f32 %v1663, %v1827
        %v1926 = vadd.f32 %v1664, %v1830
        %v1927 = vadd.f32 %v1665, %v1835
        %v1928 = vadd.f32 %v1666, %v1838
        %v1929 = vadd.f32 %v1667, %v1843
        %v1930 = vadd.f32 %v1668, %v1846
        %v1931 = vadd.f32 %v1669, %v1851
        %v1932 = vadd.f32 %v1670, %v1854
        %v1933 = vadd.f32 %v1671, %v1859
        %v1934 = vadd.f32 %v1672, %v1862
        %v1935 = vadd.f32 %v1673, %v1867
        %v1936 = vadd.f32 %v1674, %v1870
        %v1937 = vadd.f32 %v1675, %v1875
        %v1938 = vadd.f32 %v1676, %v1878
        %v1939 = vadd.f32 %v1677, %v1883
        %v1940 = vadd.f32 %v1678, %v1886
        %v1941 = vadd.f32 %v1679, %v1891
        %v1942 = vadd.f32 %v1680, %v1894
        %v1943 = vadd.f32 %v1681, %v1899
        %v1944 = vadd.f32 %v1682, %v1902
        %v1945 = vadd.f32 %v1683, %v1907
        %v1946 = vadd.f32 %v1684, %v1910
        %v1947 = vadd.f32 %v1685, %v1915
        %v1948 = vadd.f32 %v1686, %v1918
        %v1949 = vld [vmem:[%s168 + $0x21] sm:$0xff]
        %v1950 = vld [vmem:[%s168 + $0x29] sm:$0xff]
        %v1951 = vld [vmem:[%s168 + $0x31] sm:$0xff]
        %v1952 = vld [vmem:[%s168 + $0x39] sm:$0xff]
        %v1953 = vld [vmem:[%s168 + $0x41] sm:$0xff]
        %v1954 = vld [vmem:[%s168 + $0x49] sm:$0xff]
        %v1955 = vld [vmem:[%s168 + $0x51] sm:$0xff]
        %v1956 = vld [vmem:[%s168 + $0x59] sm:$0xff]
        %v1957 = vld [vmem:[%s168 + $0x61] sm:$0xff]
        %v1958 = vld [vmem:[%s168 + $0x69] sm:$0xff]
        %v1959 = vld [vmem:[%s168 + $0x71] sm:$0xff]
        %v1960 = vld [vmem:[%s168 + $0x79] sm:$0xff]
        %v1961 = vld [vmem:[%s168 + $0x81] sm:$0xff]
        %v1962 = vld [vmem:[%s168 + $0x89] sm:$0xff]
        %v1963 = vld [vmem:[%s168 + $0x91] sm:$0xff]
        %v1964 = vld [vmem:[%s168 + $0x99] sm:$0xff]
        %v1965 = vld [vmem:[%s168 + $0xa1] sm:$0xff]
        %v1966 = vld [vmem:[%s168 + $0xa9] sm:$0xff]
        %v1967 = vld [vmem:[%s168 + $0xb1] sm:$0xff]
        %v1968 = vld [vmem:[%s168 + $0xb9] sm:$0xff]
        %v1969 = vld [vmem:[%s168 + $0xc1] sm:$0xff]
        %v1970 = vld [vmem:[%s168 + $0xc9] sm:$0xff]
        %v1971 = vld [vmem:[%s168 + $0xd1] sm:$0xff]
        %v1972 = vld [vmem:[%s168 + $0xd9] sm:$0xff]
        %v1973 = vld [vmem:[%s168 + $0xe1] sm:$0xff]
        %v1974 = vld [vmem:[%s168 + $0xe9] sm:$0xff]
        %v1975 = vld [vmem:[%s168 + $0xf1] sm:$0xff]
        %v1976 = vld [vmem:[%s168 + $0xf9] sm:$0xff]
        %v1977 = vpack.c.bf16 %v1950, %v1949
        %v1978 = vpack.c.bf16 %v1952, %v1951
        %v1979 = vpack.c.bf16 %v1954, %v1953
        %v1980 = vpack.c.bf16 %v1956, %v1955
        %v1981 = vpack.c.bf16 %v1958, %v1957
        %v1982 = vpack.c.bf16 %v1960, %v1959
        %v1983 = vpack.c.bf16 %v1962, %v1961
        %v1984 = vpack.c.bf16 %v1964, %v1963
        %v1985 = vpack.c.bf16 %v1966, %v1965
        %v1986 = vpack.c.bf16 %v1968, %v1967
        %v1987 = vpack.c.bf16 %v1970, %v1969
        %v1988 = vpack.c.bf16 %v1972, %v1971
        %v1989 = vpack.c.bf16 %v1974, %v1973
        %v1990 = vpack.c.bf16 %v1976, %v1975
        %s1991 = scalar_lea.vmem %s1, 14
        %v1992 = vld [vmem:[%s1991] sm:$0x3]
        %v1994 = vsel %vm257, %v1977, 0
        %v1997 = vsel %vm257, %v1978, 0
        %v2000 = vsel %vm257, %v1979, 0
        %v2003 = vsel %vm257, %v1980, 0
        %v2006 = vsel %vm257, %v1981, 0
        %v2009 = vsel %vm257, %v1982, 0
        %v2012 = vsel %vm257, %v1983, 0
        %v2015 = vsel %vm257, %v1984, 0
        %v2018 = vsel %vm257, %v1985, 0
        %v2021 = vsel %vm257, %v1986, 0
        %v2024 = vsel %vm257, %v1987, 0
        %v2027 = vsel %vm257, %v1988, 0
        %v2030 = vsel %vm257, %v1989, 0
        %v2033 = vsel %vm257, %v1990, 0
        %v2036 = vsel %vm300, %v1992, 0
        %2038 = vmatprep.subr.bf16.mxu0 0
        %2039 = vmatpush1.bf16.msra.mxu0 %v2036
        %2040 = vmatprep.subr.bf16.mxu0 0
        %2041 = vmatpush1.bf16.msra.mxu0 0
        %2042 = vmatprep.subr.bf16.mxu0 0
        %2043 = vmatpush1.bf16.msra.mxu0 0
        %2044 = vmatprep.subr.bf16.mxu0 0
        %2045 = vmatpush1.bf16.msra.mxu0 0
        %2046 = vmatprep.subr.bf16.mxu0 0
        %2047 = vmatpush1.bf16.msra.mxu0 0
        %2048 = vmatprep.subr.bf16.mxu0 0
        %2049 = vmatpush1.bf16.msra.mxu0 0
        %2050 = vmatprep.subr.bf16.mxu0 0
        %2051 = vmatpush1.bf16.msra.mxu0 0
        %2052 = vmatprep.subr.bf16.mxu0 0
        %2053 = vmatpush1.bf16.msra.mxu0 0
        %2054 = vmatprep.subr.bf16.mxu0 0
        %2055 = vmatpush1.bf16.msra.mxu0 0
        %2056 = vmatprep.subr.bf16.mxu0 0
        %2057 = vmatpush1.bf16.msra.mxu0 0
        %2058 = vmatprep.subr.bf16.mxu0 0
        %2059 = vmatpush1.bf16.msra.mxu0 0
        %2060 = vmatprep.subr.bf16.mxu0 0
        %2061 = vmatpush1.bf16.msra.mxu0 0
        %2062 = vmatprep.subr.bf16.mxu0 0
        %2063 = vmatpush1.bf16.msra.mxu0 0
        %2064 = vmatprep.subr.bf16.mxu0 0
        %2065 = vmatpush1.bf16.msra.mxu0 0
        %2066 = vmatprep.subr.bf16.mxu0 0
        %2067 = vmatpush1.bf16.msra.mxu0 0
        %2068 = vmatprep.subr.bf16.mxu0 0
        %2069 = vmatpush1.bf16.msra.mxu0 0
        %2070 = vmatprep.mubr.bf16.mxu0 0
        %2071 = vmatmul.mubr.bf16.gmra.mrb[0].mxu0 %v1994
        %v2072 = vpop.f32.mrb[0].mxu0
        %v2073 = vadd.f32 0.0, %v2072
        %v2074 = vpop.f32.mrb[0].mxu0
        %v2075 = vpop.f32.mrb[0].mxu0
        %v2076 = vadd.f32 0.0, %v2075
        %v2077 = vpop.f32.mrb[0].mxu0
        %2078 = vmatprep.mubr.bf16.mxu0 0
        %2079 = vmatmul.mubr.bf16.gmra.mrb[0].mxu0 %v1997
        %v2080 = vpop.f32.mrb[0].mxu0
        %v2081 = vadd.f32 0.0, %v2080
        %v2082 = vpop.f32.mrb[0].mxu0
        %v2083 = vpop.f32.mrb[0].mxu0
        %v2084 = vadd.f32 0.0, %v2083
        %v2085 = vpop.f32.mrb[0].mxu0
        %2086 = vmatprep.mubr.bf16.mxu0 0
        %2087 = vmatmul.mubr.bf16.gmra.mrb[0].mxu0 %v2000
        %v2088 = vpop.f32.mrb[0].mxu0
        %v2089 = vadd.f32 0.0, %v2088
        %v2090 = vpop.f32.mrb[0].mxu0
        %v2091 = vpop.f32.mrb[0].mxu0
        %v2092 = vadd.f32 0.0, %v2091
        %v2093 = vpop.f32.mrb[0].mxu0
        %2094 = vmatprep.mubr.bf16.mxu0 0
        %2095 = vmatmul.mubr.bf16.gmra.mrb[0].mxu0 %v2003
        %v2096 = vpop.f32.mrb[0].mxu0
        %v2097 = vadd.f32 0.0, %v2096
        %v2098 = vpop.f32.mrb[0].mxu0
        %v2099 = vpop.f32.mrb[0].mxu0
        %v2100 = vadd.f32 0.0, %v2099
        %v2101 = vpop.f32.mrb[0].mxu0
        %2102 = vmatprep.mubr.bf16.mxu0 0
        %2103 = vmatmul.mubr.bf16.gmra.mrb[0].mxu0 %v2006
        %v2104 = vpop.f32.mrb[0].mxu0
        %v2105 = vadd.f32 0.0, %v2104
        %v2106 = vpop.f32.mrb[0].mxu0
        %v2107 = vpop.f32.mrb[0].mxu0
        %v2108 = vadd.f32 0.0, %v2107
        %v2109 = vpop.f32.mrb[0].mxu0
        %2110 = vmatprep.mubr.bf16.mxu0 0
        %2111 = vmatmul.mubr.bf16.gmra.mrb[0].mxu0 %v2009
        %v2112 = vpop.f32.mrb[0].mxu0
        %v2113 = vadd.f32 0.0, %v2112
        %v2114 = vpop.f32.mrb[0].mxu0
        %v2115 = vpop.f32.mrb[0].mxu0
        %v2116 = vadd.f32 0.0, %v2115
        %v2117 = vpop.f32.mrb[0].mxu0
        %2118 = vmatprep.mubr.bf16.mxu0 0
        %2119 = vmatmul.mubr.bf16.gmra.mrb[0].mxu0 %v2012
        %v2120 = vpop.f32.mrb[0].mxu0
        %v2121 = vadd.f32 0.0, %v2120
        %v2122 = vpop.f32.mrb[0].mxu0
        %v2123 = vpop.f32.mrb[0].mxu0
        %v2124 = vadd.f32 0.0, %v2123
        %v2125 = vpop.f32.mrb[0].mxu0
        %2126 = vmatprep.mubr.bf16.mxu0 0
        %2127 = vmatmul.mubr.bf16.gmra.mrb[0].mxu0 %v2015
        %v2128 = vpop.f32.mrb[0].mxu0
        %v2129 = vadd.f32 0.0, %v2128
        %v2130 = vpop.f32.mrb[0].mxu0
        %v2131 = vpop.f32.mrb[0].mxu0
        %v2132 = vadd.f32 0.0, %v2131
        %v2133 = vpop.f32.mrb[0].mxu0
        %2134 = vmatprep.mubr.bf16.mxu0 0
        %2135 = vmatmul.mubr.bf16.gmra.mrb[0].mxu0 %v2018
        %v2136 = vpop.f32.mrb[0].mxu0
        %v2137 = vadd.f32 0.0, %v2136
        %v2138 = vpop.f32.mrb[0].mxu0
        %v2139 = vpop.f32.mrb[0].mxu0
        %v2140 = vadd.f32 0.0, %v2139
        %v2141 = vpop.f32.mrb[0].mxu0
        %2142 = vmatprep.mubr.bf16.mxu0 0
        %2143 = vmatmul.mubr.bf16.gmra.mrb[0].mxu0 %v2021
        %v2144 = vpop.f32.mrb[0].mxu0
        %v2145 = vadd.f32 0.0, %v2144
        %v2146 = vpop.f32.mrb[0].mxu0
        %v2147 = vpop.f32.mrb[0].mxu0
        %v2148 = vadd.f32 0.0, %v2147
        %v2149 = vpop.f32.mrb[0].mxu0
        %2150 = vmatprep.mubr.bf16.mxu0 0
        %2151 = vmatmul.mubr.bf16.gmra.mrb[0].mxu0 %v2024
        %v2152 = vpop.f32.mrb[0].mxu0
        %v2153 = vadd.f32 0.0, %v2152
        %v2154 = vpop.f32.mrb[0].mxu0
        %v2155 = vpop.f32.mrb[0].mxu0
        %v2156 = vadd.f32 0.0, %v2155
        %v2157 = vpop.f32.mrb[0].mxu0
        %2158 = vmatprep.mubr.bf16.mxu0 0
        %2159 = vmatmul.mubr.bf16.gmra.mrb[0].mxu0 %v2027
        %v2160 = vpop.f32.mrb[0].mxu0
        %v2161 = vadd.f32 0.0, %v2160
        %v2162 = vpop.f32.mrb[0].mxu0
        %v2163 = vpop.f32.mrb[0].mxu0
        %v2164 = vadd.f32 0.0, %v2163
        %v2165 = vpop.f32.mrb[0].mxu0
        %2166 = vmatprep.mubr.bf16.mxu0 0
        %2167 = vmatmul.mubr.bf16.gmra.mrb[0].mxu0 %v2030
        %v2168 = vpop.f32.mrb[0].mxu0
        %v2169 = vadd.f32 0.0, %v2168
        %v2170 = vpop.f32.mrb[0].mxu0
        %v2171 = vpop.f32.mrb[0].mxu0
        %v2172 = vadd.f32 0.0, %v2171
        %v2173 = vpop.f32.mrb[0].mxu0
        %2174 = vmatprep.mubr.bf16.mxu0 0
        %2175 = vmatmul.mubr.bf16.gmra.mrb[0].mxu0 %v2033
        %v2176 = vpop.f32.mrb[0].mxu0
        %v2177 = vadd.f32 0.0, %v2176
        %v2178 = vpop.f32.mrb[0].mxu0
        %v2179 = vpop.f32.mrb[0].mxu0
        %v2180 = vadd.f32 0.0, %v2179
        %v2181 = vpop.f32.mrb[0].mxu0
        %2182 = vdwg.mxu0
        %v2183 = vadd.f32 %v1921, %v2073
        %v2184 = vadd.f32 %v1922, %v2076
        %v2185 = vadd.f32 %v1923, %v2081
        %v2186 = vadd.f32 %v1924, %v2084
        %v2187 = vadd.f32 %v1925, %v2089
        %v2188 = vadd.f32 %v1926, %v2092
        %v2189 = vadd.f32 %v1927, %v2097
        %v2190 = vadd.f32 %v1928, %v2100
        %v2191 = vadd.f32 %v1929, %v2105
        %v2192 = vadd.f32 %v1930, %v2108
        %v2193 = vadd.f32 %v1931, %v2113
        %v2194 = vadd.f32 %v1932, %v2116
        %v2195 = vadd.f32 %v1933, %v2121
        %v2196 = vadd.f32 %v1934, %v2124
        %v2197 = vadd.f32 %v1935, %v2129
        %v2198 = vadd.f32 %v1936, %v2132
        %v2199 = vadd.f32 %v1937, %v2137
        %v2200 = vadd.f32 %v1938, %v2140
        %v2201 = vadd.f32 %v1939, %v2145
        %v2202 = vadd.f32 %v1940, %v2148
        %v2203 = vadd.f32 %v1941, %v2153
        %v2204 = vadd.f32 %v1942, %v2156
        %v2205 = vadd.f32 %v1943, %v2161
        %v2206 = vadd.f32 %v1944, %v2164
        %v2207 = vadd.f32 %v1945, %v2169
        %v2208 = vadd.f32 %v1946, %v2172
        %v2209 = vadd.f32 %v1947, %v2177
        %v2210 = vadd.f32 %v1948, %v2180
        %v2211 = vld [vmem:[%s168 + $0x22] sm:$0xff]
        %v2212 = vld [vmem:[%s168 + $0x2a] sm:$0xff]
        %v2213 = vld [vmem:[%s168 + $0x32] sm:$0xff]
        %v2214 = vld [vmem:[%s168 + $0x3a] sm:$0xff]
        %v2215 = vld [vmem:[%s168 + $0x42] sm:$0xff]
        %v2216 = vld [vmem:[%s168 + $0x4a] sm:$0xff]
        %v2217 = vld [vmem:[%s168 + $0x52] sm:$0xff]
        %v2218 = vld [vmem:[%s168 + $0x5a] sm:$0xff]
        %v2219 = vld [vmem:[%s168 + $0x62] sm:$0xff]
        %v2220 = vld [vmem:[%s168 + $0x6a] sm:$0xff]
        %v2221 = vld [vmem:[%s168 + $0x72] sm:$0xff]
        %v2222 = vld [vmem:[%s168 + $0x7a] sm:$0xff]
        %v2223 = vld [vmem:[%s168 + $0x82] sm:$0xff]
        %v2224 = vld [vmem:[%s168 + $0x8a] sm:$0xff]
        %v2225 = vld [vmem:[%s168 + $0x92] sm:$0xff]
        %v2226 = vld [vmem:[%s168 + $0x9a] sm:$0xff]
        %v2227 = vld [vmem:[%s168 + $0xa2] sm:$0xff]
        %v2228 = vld [vmem:[%s168 + $0xaa] sm:$0xff]
        %v2229 = vld [vmem:[%s168 + $0xb2] sm:$0xff]
        %v2230 = vld [vmem:[%s168 + $0xba] sm:$0xff]
        %v2231 = vld [vmem:[%s168 + $0xc2] sm:$0xff]
        %v2232 = vld [vmem:[%s168 + $0xca] sm:$0xff]
        %v2233 = vld [vmem:[%s168 + $0xd2] sm:$0xff]
        %v2234 = vld [vmem:[%s168 + $0xda] sm:$0xff]
        %v2235 = vld [vmem:[%s168 + $0xe2] sm:$0xff]
        %v2236 = vld [vmem:[%s168 + $0xea] sm:$0xff]
        %v2237 = vld [vmem:[%s168 + $0xf2] sm:$0xff]
        %v2238 = vld [vmem:[%s168 + $0xfa] sm:$0xff]
        %v2239 = vpack.c.bf16 %v2212, %v2211
        %v2240 = vpack.c.bf16 %v2214, %v2213
        %v2241 = vpack.c.bf16 %v2216, %v2215
        %v2242 = vpack.c.bf16 %v2218, %v2217
        %v2243 = vpack.c.bf16 %v2220, %v2219
        %v2244 = vpack.c.bf16 %v2222, %v2221
        %v2245 = vpack.c.bf16 %v2224, %v2223
        %v2246 = vpack.c.bf16 %v2226, %v2225
        %v2247 = vpack.c.bf16 %v2228, %v2227
        %v2248 = vpack.c.bf16 %v2230, %v2229
        %v2249 = vpack.c.bf16 %v2232, %v2231
        %v2250 = vpack.c.bf16 %v2234, %v2233
        %v2251 = vpack.c.bf16 %v2236, %v2235
        %v2252 = vpack.c.bf16 %v2238, %v2237
        %s2253 = scalar_lea.vmem %s1, 16
        %v2254 = vld [vmem:[%s2253] sm:$0x3]
        %v2256 = vsel %vm257, %v2239, 0
        %v2259 = vsel %vm257, %v2240, 0
        %v2262 = vsel %vm257, %v2241, 0
        %v2265 = vsel %vm257, %v2242, 0
        %v2268 = vsel %vm257, %v2243, 0
        %v2271 = vsel %vm257, %v2244, 0
        %v2274 = vsel %vm257, %v2245, 0
        %v2277 = vsel %vm257, %v2246, 0
        %v2280 = vsel %vm257, %v2247, 0
        %v2283 = vsel %vm257, %v2248, 0
        %v2286 = vsel %vm257, %v2249, 0
        %v2289 = vsel %vm257, %v2250, 0
        %v2292 = vsel %vm257, %v2251, 0
        %v2295 = vsel %vm257, %v2252, 0
        %v2298 = vsel %vm300, %v2254, 0
        %2300 = vmatprep.subr.bf16.mxu0 0
        %2301 = vmatpush1.bf16.msra.mxu0 %v2298
        %2302 = vmatprep.subr.bf16.mxu0 0
        %2303 = vmatpush1.bf16.msra.mxu0 0
        %2304 = vmatprep.subr.bf16.mxu0 0
        %2305 = vmatpush1.bf16.msra.mxu0 0
        %2306 = vmatprep.subr.bf16.mxu0 0
        %2307 = vmatpush1.bf16.msra.mxu0 0
        %2308 = vmatprep.subr.bf16.mxu0 0
        %2309 = vmatpush1.bf16.msra.mxu0 0
        %2310 = vmatprep.subr.bf16.mxu0 0
        %2311 = vmatpush1.bf16.msra.mxu0 0
        %2312 = vmatprep.subr.bf16.mxu0 0
        %2313 = vmatpush1.bf16.msra.mxu0 0
        %2314 = vmatprep.subr.bf16.mxu0 0
        %2315 = vmatpush1.bf16.msra.mxu0 0
        %2316 = vmatprep.subr.bf16.mxu0 0
        %2317 = vmatpush1.bf16.msra.mxu0 0
        %2318 = vmatprep.subr.bf16.mxu0 0
        %2319 = vmatpush1.bf16.msra.mxu0 0
        %2320 = vmatprep.subr.bf16.mxu0 0
        %2321 = vmatpush1.bf16.msra.mxu0 0
        %2322 = vmatprep.subr.bf16.mxu0 0
        %2323 = vmatpush1.bf16.msra.mxu0 0
        %2324 = vmatprep.subr.bf16.mxu0 0
        %2325 = vmatpush1.bf16.msra.mxu0 0
        %2326 = vmatprep.subr.bf16.mxu0 0
        %2327 = vmatpush1.bf16.msra.mxu0 0
        %2328 = vmatprep.subr.bf16.mxu0 0
        %2329 = vmatpush1.bf16.msra.mxu0 0
        %2330 = vmatprep.subr.bf16.mxu0 0
        %2331 = vmatpush1.bf16.msra.mxu0 0
        %2332 = vmatprep.mubr.bf16.mxu0 0
        %2333 = vmatmul.mubr.bf16.gmra.mrb[0].mxu0 %v2256
        %v2334 = vpop.f32.mrb[0].mxu0
        %v2335 = vadd.f32 0.0, %v2334
        %v2336 = vpop.f32.mrb[0].mxu0
        %v2337 = vpop.f32.mrb[0].mxu0
        %v2338 = vadd.f32 0.0, %v2337
        %v2339 = vpop.f32.mrb[0].mxu0
        %2340 = vmatprep.mubr.bf16.mxu0 0
        %2341 = vmatmul.mubr.bf16.gmra.mrb[0].mxu0 %v2259
        %v2342 = vpop.f32.mrb[0].mxu0
        %v2343 = vadd.f32 0.0, %v2342
        %v2344 = vpop.f32.mrb[0].mxu0
        %v2345 = vpop.f32.mrb[0].mxu0
        %v2346 = vadd.f32 0.0, %v2345
        %v2347 = vpop.f32.mrb[0].mxu0
        %2348 = vmatprep.mubr.bf16.mxu0 0
        %2349 = vmatmul.mubr.bf16.gmra.mrb[0].mxu0 %v2262
        %v2350 = vpop.f32.mrb[0].mxu0
        %v2351 = vadd.f32 0.0, %v2350
        %v2352 = vpop.f32.mrb[0].mxu0
        %v2353 = vpop.f32.mrb[0].mxu0
        %v2354 = vadd.f32 0.0, %v2353
        %v2355 = vpop.f32.mrb[0].mxu0
        %2356 = vmatprep.mubr.bf16.mxu0 0
        %2357 = vmatmul.mubr.bf16.gmra.mrb[0].mxu0 %v2265
        %v2358 = vpop.f32.mrb[0].mxu0
        %v2359 = vadd.f32 0.0, %v2358
        %v2360 = vpop.f32.mrb[0].mxu0
        %v2361 = vpop.f32.mrb[0].mxu0
        %v2362 = vadd.f32 0.0, %v2361
        %v2363 = vpop.f32.mrb[0].mxu0
        %2364 = vmatprep.mubr.bf16.mxu0 0
        %2365 = vmatmul.mubr.bf16.gmra.mrb[0].mxu0 %v2268
        %v2366 = vpop.f32.mrb[0].mxu0
        %v2367 = vadd.f32 0.0, %v2366
        %v2368 = vpop.f32.mrb[0].mxu0
        %v2369 = vpop.f32.mrb[0].mxu0
        %v2370 = vadd.f32 0.0, %v2369
        %v2371 = vpop.f32.mrb[0].mxu0
        %2372 = vmatprep.mubr.bf16.mxu0 0
        %2373 = vmatmul.mubr.bf16.gmra.mrb[0].mxu0 %v2271
        %v2374 = vpop.f32.mrb[0].mxu0
        %v2375 = vadd.f32 0.0, %v2374
        %v2376 = vpop.f32.mrb[0].mxu0
        %v2377 = vpop.f32.mrb[0].mxu0
        %v2378 = vadd.f32 0.0, %v2377
        %v2379 = vpop.f32.mrb[0].mxu0
        %2380 = vmatprep.mubr.bf16.mxu0 0
        %2381 = vmatmul.mubr.bf16.gmra.mrb[0].mxu0 %v2274
        %v2382 = vpop.f32.mrb[0].mxu0
        %v2383 = vadd.f32 0.0, %v2382
        %v2384 = vpop.f32.mrb[0].mxu0
        %v2385 = vpop.f32.mrb[0].mxu0
        %v2386 = vadd.f32 0.0, %v2385
        %v2387 = vpop.f32.mrb[0].mxu0
        %2388 = vmatprep.mubr.bf16.mxu0 0
        %2389 = vmatmul.mubr.bf16.gmra.mrb[0].mxu0 %v2277
        %v2390 = vpop.f32.mrb[0].mxu0
        %v2391 = vadd.f32 0.0, %v2390
        %v2392 = vpop.f32.mrb[0].mxu0
        %v2393 = vpop.f32.mrb[0].mxu0
        %v2394 = vadd.f32 0.0, %v2393
        %v2395 = vpop.f32.mrb[0].mxu0
        %2396 = vmatprep.mubr.bf16.mxu0 0
        %2397 = vmatmul.mubr.bf16.gmra.mrb[0].mxu0 %v2280
        %v2398 = vpop.f32.mrb[0].mxu0
        %v2399 = vadd.f32 0.0, %v2398
        %v2400 = vpop.f32.mrb[0].mxu0
        %v2401 = vpop.f32.mrb[0].mxu0
        %v2402 = vadd.f32 0.0, %v2401
        %v2403 = vpop.f32.mrb[0].mxu0
        %2404 = vmatprep.mubr.bf16.mxu0 0
        %2405 = vmatmul.mubr.bf16.gmra.mrb[0].mxu0 %v2283
        %v2406 = vpop.f32.mrb[0].mxu0
        %v2407 = vadd.f32 0.0, %v2406
        %v2408 = vpop.f32.mrb[0].mxu0
        %v2409 = vpop.f32.mrb[0].mxu0
        %v2410 = vadd.f32 0.0, %v2409
        %v2411 = vpop.f32.mrb[0].mxu0
        %2412 = vmatprep.mubr.bf16.mxu0 0
        %2413 = vmatmul.mubr.bf16.gmra.mrb[0].mxu0 %v2286
        %v2414 = vpop.f32.mrb[0].mxu0
        %v2415 = vadd.f32 0.0, %v2414
        %v2416 = vpop.f32.mrb[0].mxu0
        %v2417 = vpop.f32.mrb[0].mxu0
        %v2418 = vadd.f32 0.0, %v2417
        %v2419 = vpop.f32.mrb[0].mxu0
        %2420 = vmatprep.mubr.bf16.mxu0 0
        %2421 = vmatmul.mubr.bf16.gmra.mrb[0].mxu0 %v2289
        %v2422 = vpop.f32.mrb[0].mxu0
        %v2423 = vadd.f32 0.0, %v2422
        %v2424 = vpop.f32.mrb[0].mxu0
        %v2425 = vpop.f32.mrb[0].mxu0
        %v2426 = vadd.f32 0.0, %v2425
        %v2427 = vpop.f32.mrb[0].mxu0
        %2428 = vmatprep.mubr.bf16.mxu0 0
        %2429 = vmatmul.mubr.bf16.gmra.mrb[0].mxu0 %v2292
        %v2430 = vpop.f32.mrb[0].mxu0
        %v2431 = vadd.f32 0.0, %v2430
        %v2432 = vpop.f32.mrb[0].mxu0
        %v2433 = vpop.f32.mrb[0].mxu0
        %v2434 = vadd.f32 0.0, %v2433
        %v2435 = vpop.f32.mrb[0].mxu0
        %2436 = vmatprep.mubr.bf16.mxu0 0
        %2437 = vmatmul.mubr.bf16.gmra.mrb[0].mxu0 %v2295
        %v2438 = vpop.f32.mrb[0].mxu0
        %v2439 = vadd.f32 0.0, %v2438
        %v2440 = vpop.f32.mrb[0].mxu0
        %v2441 = vpop.f32.mrb[0].mxu0
        %v2442 = vadd.f32 0.0, %v2441
        %v2443 = vpop.f32.mrb[0].mxu0
        %2444 = vdwg.mxu0
        %v2445 = vadd.f32 %v2183, %v2335
        %v2446 = vadd.f32 %v2184, %v2338
        %v2447 = vadd.f32 %v2185, %v2343
        %v2448 = vadd.f32 %v2186, %v2346
        %v2449 = vadd.f32 %v2187, %v2351
        %v2450 = vadd.f32 %v2188, %v2354
        %v2451 = vadd.f32 %v2189, %v2359
        %v2452 = vadd.f32 %v2190, %v2362
        %v2453 = vadd.f32 %v2191, %v2367
        %v2454 = vadd.f32 %v2192, %v2370
        %v2455 = vadd.f32 %v2193, %v2375
        %v2456 = vadd.f32 %v2194, %v2378
        %v2457 = vadd.f32 %v2195, %v2383
        %v2458 = vadd.f32 %v2196, %v2386
        %v2459 = vadd.f32 %v2197, %v2391
        %v2460 = vadd.f32 %v2198, %v2394
        %v2461 = vadd.f32 %v2199, %v2399
        %v2462 = vadd.f32 %v2200, %v2402
        %v2463 = vadd.f32 %v2201, %v2407
        %v2464 = vadd.f32 %v2202, %v2410
        %v2465 = vadd.f32 %v2203, %v2415
        %v2466 = vadd.f32 %v2204, %v2418
        %v2467 = vadd.f32 %v2205, %v2423
        %v2468 = vadd.f32 %v2206, %v2426
        %v2469 = vadd.f32 %v2207, %v2431
        %v2470 = vadd.f32 %v2208, %v2434
        %v2471 = vadd.f32 %v2209, %v2439
        %v2472 = vadd.f32 %v2210, %v2442
        %v2473 = vld [vmem:[%s2] sm:$0x1]
        %v2475 = vlaneseq
        %v2476 = vshrl.u32 %v2475, 7
        %v2477 = vsub.s32 0, %v2476
        %v2478 = vrot.slane %v2473, %v2477
        %v2480 = vadd.f32 %v2445, %v2478
        %v2481 = vadd.f32 %v2446, %v2478
        %v2482 = vadd.f32 %v2447, %v2478
        %v2483 = vadd.f32 %v2448, %v2478
        %v2484 = vadd.f32 %v2449, %v2478
        %v2485 = vadd.f32 %v2450, %v2478
        %v2486 = vadd.f32 %v2451, %v2478
        %v2487 = vadd.f32 %v2452, %v2478
        %v2488 = vadd.f32 %v2453, %v2478
        %v2489 = vadd.f32 %v2454, %v2478
        %v2490 = vadd.f32 %v2455, %v2478
        %v2491 = vadd.f32 %v2456, %v2478
        %v2492 = vadd.f32 %v2457, %v2478
        %v2493 = vadd.f32 %v2458, %v2478
        %v2494 = vadd.f32 %v2459, %v2478
        %v2495 = vadd.f32 %v2460, %v2478
        %v2496 = vadd.f32 %v2461, %v2478
        %v2497 = vadd.f32 %v2462, %v2478
        %v2498 = vadd.f32 %v2463, %v2478
        %v2499 = vadd.f32 %v2464, %v2478
        %v2500 = vadd.f32 %v2465, %v2478
        %v2501 = vadd.f32 %v2466, %v2478
        %v2502 = vadd.f32 %v2467, %v2478
        %v2503 = vadd.f32 %v2468, %v2478
        %v2504 = vadd.f32 %v2469, %v2478
        %v2505 = vadd.f32 %v2470, %v2478
        %v2506 = vadd.f32 %v2471, %v2478
        %v2507 = vadd.f32 %v2472, %v2478
        %2508 = vst [vmem:[%s163] sm:$0xff] %v2480
        %2509 = vst [vmem:[%s163 + $0x8] sm:$0xff] %v2481
        %2510 = vst [vmem:[%s163 + $0x10] sm:$0xff] %v2482
        %2511 = vst [vmem:[%s163 + $0x18] sm:$0xff] %v2483
        %2512 = vst [vmem:[%s163 + $0x20] sm:$0xff] %v2484
        %2513 = vst [vmem:[%s163 + $0x28] sm:$0xff] %v2485
        %2514 = vst [vmem:[%s163 + $0x30] sm:$0xff] %v2486
        %2515 = vst [vmem:[%s163 + $0x38] sm:$0xff] %v2487
        %2516 = vst [vmem:[%s163 + $0x40] sm:$0xff] %v2488
        %2517 = vst [vmem:[%s163 + $0x48] sm:$0xff] %v2489
        %2518 = vst [vmem:[%s163 + $0x50] sm:$0xff] %v2490
        %2519 = vst [vmem:[%s163 + $0x58] sm:$0xff] %v2491
        %2520 = vst [vmem:[%s163 + $0x60] sm:$0xff] %v2492
        %2521 = vst [vmem:[%s163 + $0x68] sm:$0xff] %v2493
        %2522 = vst [vmem:[%s163 + $0x70] sm:$0xff] %v2494
        %2523 = vst [vmem:[%s163 + $0x78] sm:$0xff] %v2495
        %2524 = vst [vmem:[%s163 + $0x80] sm:$0xff] %v2496
        %2525 = vst [vmem:[%s163 + $0x88] sm:$0xff] %v2497
        %2526 = vst [vmem:[%s163 + $0x90] sm:$0xff] %v2498
        %2527 = vst [vmem:[%s163 + $0x98] sm:$0xff] %v2499
        %2528 = vst [vmem:[%s163 + $0xa0] sm:$0xff] %v2500
        %2529 = vst [vmem:[%s163 + $0xa8] sm:$0xff] %v2501
        %2530 = vst [vmem:[%s163 + $0xb0] sm:$0xff] %v2502
        %2531 = vst [vmem:[%s163 + $0xb8] sm:$0xff] %v2503
        %2532 = vst [vmem:[%s163 + $0xc0] sm:$0xff] %v2504
        %2533 = vst [vmem:[%s163 + $0xc8] sm:$0xff] %v2505
        %2534 = vst [vmem:[%s163 + $0xd0] sm:$0xff] %v2506
        %2535 = vst [vmem:[%s163 + $0xd8] sm:$0xff] %v2507
        %s2536 = sand.u32 %s93, 1
        %s2537 = scalar_lea.sflag [#allocation3], %s2536
        %s2538 = sand.u32 %s93, 1
        %s2539 = smul.addr %s2538, 224
        %s2540 = scalar_lea.vmem [#allocation2], %s2539
        // Predicated region
        $region33: #{tpu_custom_call.1} parent=31 // pred_check
          %p2541 = pneg %p103
        $region34: #{tpu_custom_call.1} parent=31 // pred_check_branch
          %2543 = sbr.rel (%p2541) target = $region36
        $region35: #{tpu_custom_call.1} parent=31 // pred_region
          %s2545 = ssub.s32 3584, 3584
          %2546 = vsyncadd %s2537, %s2545
          %s2547 = smul.addr %s17, 28
          %s2548 = smul.addr %s2547, 128
          %s2549 = scalar_lea.hbm %s3, %s2548
          %s2550 = sshll.u32 %s2540, 4
          %s2551 = int_to_ptr.vmem [resolvable:$true] %s2550
          %2556 = dma.vmem_to_hbm [thread:$0]  %s2551, 3584, %s2549, %s2537, 128, 128, 8
        $region36: #{tpu_custom_call.1} parent=31 // pred_fallthru
          _
      $region32: #{tpu_custom_call.1} parent=5 // pred_fallthru
        _
      %p2557 = scmp.le.s32.totalorder 2, %s12
      // Predicated region
      $region37: #{tpu_custom_call.1} parent=5 // pred_check
        %p2558 = pneg %p2557
      $region38: #{tpu_custom_call.1} parent=5 // pred_check_branch
        %2560 = sbr.rel (%p2558) target = $region40
      $region39: #{tpu_custom_call.1} parent=5 // pred_region
        %s2561 = ssub.s32 %s12, 2
        // Predicated region
        $region41: #{tpu_custom_call.1} parent=39 // pred_check
          %p2562 = pneg %p109
        $region42: #{tpu_custom_call.1} parent=39 // pred_check_branch
          %2564 = sbr.rel (%p2562) target = $region44
        $region43: #{tpu_custom_call.1} parent=39 // pred_region
          %s2565 = sand.u32 %s94, 1
          %s2566 = scalar_lea.sflag [#allocation3], %s2565
          %s2567 = sand.u32 %s94, 1
          %s2568 = smul.addr %s2567, 224
          %s2569 = scalar_lea.vmem [#allocation2], %s2568
          %2570 = dma.done %s2566, 3584
        $region44: #{tpu_custom_call.1} parent=39 // pred_fallthru
          _
      $region40: #{tpu_custom_call.1} parent=5 // pred_fallthru
        _
    $region6: #{tpu_custom_call.1} parent=1 // loop_footer
      %s16 = sadd.s32 1, %s12
    $region7: #{tpu_custom_call.1} parent=1 // loop_footer_branch
      %11 = sbr.rel target = $region3
    $region8: #{tpu_custom_call.1} parent=1 // loop_exit
      _
    %2571 = vsyncpa [#allocation3], 1
    %s2572 = scalar_lea.sflag [#allocation3], 1
    %2573 = vsyncpa %s2572, 1

</llo_original>
